<compile_context>
chip_gen: v7x
topology: tpu7x:2x2x1
jax: 0.10.0
libtpu: 0.0.40
codegen_flags: <defaults>
</compile_context>

<pallas_src>
import math
from functools import partial

import jax
import jax.numpy as jnp
from jax.experimental import pallas as pl
from jax.experimental.pallas import tpu as pltpu

_NEG_INF = -1e30   # finite "minus infinity" (avoids inf-inf NaNs in masked tiles)
_TL_MAX = 256      # query-length tile
_TS_MAX = 512      # key/value-length tile


def _flash_attention_kernel(q_ref, k_ref, v_ref, o_ref, m_ref, l_ref, acc_ref,
                            *, scale, num_heads, e_dim, d_dim, seq_k, ts):
    # q_ref: (1, TL, H*E), k_ref: (1, TS, H*E), v_ref: (1, TS, H*D)
    # o_ref: (1, TL, H*D)
    # scratch: m_ref/l_ref: (H, TL, 1) f32, acc_ref: (H, TL, D) f32
    s_idx = pl.program_id(2)

    @pl.when(s_idx == 0)
    def _init():
        m_ref[...] = jnp.full_like(m_ref, _NEG_INF)
        l_ref[...] = jnp.zeros_like(l_ref)
        acc_ref[...] = jnp.zeros_like(acc_ref)

    needs_mask = (seq_k % ts) != 0   # static (trace-time) decision
    if needs_mask:
        col = jax.lax.broadcasted_iota(jnp.int32, (1, ts), 1)
        valid = (s_idx * ts + col) < seq_k                      # (1, TS)

    for h in range(num_heads):
        # Scale folded into Q: (TL, E) multiplies instead of (TL, TS).
        q_h = q_ref[0, :, h * e_dim:(h + 1) * e_dim] * scale    # (TL, E)
        k_h = k_ref[0, :, h * e_dim:(h + 1) * e_dim]            # (TS, E)
        v_h = v_ref[0, :, h * d_dim:(h + 1) * d_dim]            # (TS, D)

        # scores[l, s] = sum_e q[l, e] * k[s, e]   (MXU, f32 accumulate)
        s_h = jax.lax.dot_general(
            q_h, k_h,
            dimension_numbers=(((1,), (1,)), ((), ())),
            preferred_element_type=jnp.float32,
        )                                                        # (TL, TS)
        if needs_mask:
            s_h = jnp.where(valid, s_h, _NEG_INF)

        # Online (flash) softmax update for this head.
        m_prev = m_ref[h]                                        # (TL, 1)
        l_prev = l_ref[h]                                        # (TL, 1)
        m_cur = jnp.maximum(m_prev, jnp.max(s_h, axis=-1, keepdims=True))
        alpha = jnp.exp(m_prev - m_cur)                          # (TL, 1)
        p = jnp.exp(s_h - m_cur)                                 # (TL, TS)

        l_ref[h] = alpha * l_prev + jnp.sum(p, axis=-1, keepdims=True)
        # Un-normalized PV matmul; normalization deferred to the finalize step.
        acc_ref[h] = alpha * acc_ref[h] + jax.lax.dot_general(
            p.astype(v_h.dtype), v_h,
            dimension_numbers=(((1,), (0,)), ((), ())),
            preferred_element_type=jnp.float32,
        )
        m_ref[h] = m_cur

    @pl.when(s_idx == pl.num_programs(2) - 1)
    def _finalize():
        for h in range(num_heads):
            inv_l = pl.reciprocal(l_ref[h], approx=True)         # EUP slot, ~free
            o_ref[0, :, h * d_dim:(h + 1) * d_dim] = (
                acc_ref[h] * inv_l).astype(o_ref.dtype)


def full_attention(queries, keys, values, scale=None):
    """queries: (B, L, H, E), keys: (B, S, H, E), values: (B, S, H, D) -> (B, L, H, D)."""
    B, L, H, E = queries.shape
    _, S, _, D = values.shape
    scale = float(scale) if scale is not None else 1.0 / math.sqrt(E)

    tl = L if L <= _TL_MAX else _TL_MAX
    ts = S if S <= _TS_MAX else _TS_MAX

    # Free reshapes only (no HBM transposes): fuse heads into the minor dim.
    qf = queries.reshape(B, L, H * E)
    kf = keys.reshape(B, S, H * E)
    vf = values.reshape(B, S, H * D)

    grid = (B, pl.cdiv(L, tl), pl.cdiv(S, ts))

    kernel = partial(
        _flash_attention_kernel,
        scale=scale, num_heads=H, e_dim=E, d_dim=D, seq_k=S, ts=ts,
    )

    itemsize = jnp.dtype(queries.dtype).itemsize
    cost = pl.CostEstimate(
        flops=2 * B * H * L * S * (E + D),
        transcendentals=B * H * L * S,
        bytes_accessed=itemsize * (qf.size + kf.size + vf.size + B * L * H * D),
    )

    out_flat = pl.pallas_call(
        kernel,
        out_shape=jax.ShapeDtypeStruct((B, L, H * D), queries.dtype),
        grid_spec=pltpu.PrefetchScalarGridSpec(
            num_scalar_prefetch=0,
            grid=grid,
            in_specs=[
                pl.BlockSpec((1, tl, H * E), lambda b, l, s: (b, l, 0)),
                pl.BlockSpec((1, ts, H * E), lambda b, l, s: (b, s, 0)),
                pl.BlockSpec((1, ts, H * D), lambda b, l, s: (b, s, 0)),
            ],
            out_specs=pl.BlockSpec((1, tl, H * D), lambda b, l, s: (b, l, 0)),
            scratch_shapes=[
                pltpu.VMEM((H, tl, 1), jnp.float32),   # running row-max m
                pltpu.VMEM((H, tl, 1), jnp.float32),   # running denominator l
                pltpu.VMEM((H, tl, D), jnp.float32),   # un-normalized output acc
            ],
        ),
        compiler_params=pltpu.CompilerParams(
            dimension_semantics=("parallel", "parallel", "arbitrary"),
            vmem_limit_bytes=64 * 1024 * 1024,
        ),
        cost_estimate=cost,
    )(qf, kf, vf)

    return out_flat.reshape(B, L, H, D)


def _reference(queries, keys, values, scale=None):
    B, L, H, E = queries.shape
    scale = scale if scale is not None else 1.0 / math.sqrt(E)
    scores = jnp.einsum('blhe,bshe->bhls', queries, keys)
    A = jax.nn.softmax(scale * scores, axis=-1)
    return jnp.einsum('bhls,bshd->blhd', A, values)


if __name__ == "__main__":
    B, L, S, H, E, D = 2, 8, 8, 4, 32, 32
    key = jax.random.PRNGKey(0)
    kq, kk, kv = jax.random.split(key, 3)
    queries = jax.random.normal(kq, (B, L, H, E), dtype=jnp.float32)
    keys_ = jax.random.normal(kk, (B, S, H, E), dtype=jnp.float32)
    values = jax.random.normal(kv, (B, S, H, D), dtype=jnp.float32)

    out = full_attention(queries, keys_, values)
    out = jax.block_until_ready(out)

    ref = _reference(queries, keys_, values)
    assert out.shape == (B, L, H, D)
    assert jnp.allclose(out, ref, atol=2e-3, rtol=2e-3), \
        float(jnp.max(jnp.abs(out - ref)))

    print("KERNEL_OK")
</pallas_src>

<mosaic_0001>
module attributes {stable_mosaic.version = 11 : i64} {
  func.func @_flash_attention_kernel(%arg0: i32, %arg1: i32, %arg2: i32, %arg3: memref<1x8x128xf32, #tpu.memory_space<vmem>>, %arg4: memref<1x8x128xf32, #tpu.memory_space<vmem>>, %arg5: memref<1x8x128xf32, #tpu.memory_space<vmem>>, %arg6: memref<1x8x128xf32, #tpu.memory_space<vmem>>, %arg7: memref<4x8x1xf32, #tpu.memory_space<vmem>>, %arg8: memref<4x8x1xf32, #tpu.memory_space<vmem>>, %arg9: memref<4x8x32xf32, #tpu.memory_space<vmem>>) attributes {dimension_semantics = [#tpu.dimension_semantics<parallel>, #tpu.dimension_semantics<parallel>, #tpu.dimension_semantics<arbitrary>], iteration_bounds = array<i64: 2, 1, 1>, scalar_prefetch = 0 : i64, scratch_operands = 3 : i64, tpu.core_type = #tpu.core_type<tc>, window_params = [{transform_indices = @transform_0, window_bounds = array<i64: 1, 8, 128>}, {transform_indices = @transform_1, window_bounds = array<i64: 1, 8, 128>}, {transform_indices = @transform_2, window_bounds = array<i64: 1, 8, 128>}, {transform_indices = @transform_3, window_bounds = array<i64: 1, 8, 128>}]} {
    %c0_i32 = arith.constant 0 : i32
    %0 = arith.cmpi eq, %arg2, %c0_i32 : i32
    %1 = arith.extui %0 : i1 to i32
    %c0_i32_0 = arith.constant 0 : i32
    %2 = arith.cmpi ne, %1, %c0_i32_0 : i32
    scf.if %2 {
      %cst_123 = arith.constant -1.000000e+30 : f32
      %166 = vector.broadcast %cst_123 : f32 to vector<4x8x1xf32>
      %c0_124 = arith.constant 0 : index
      %c0_125 = arith.constant 0 : index
      %c0_126 = arith.constant 0 : index
      %167 = vector.load %arg7[%c0_124, %c0_125, %c0_126] : memref<4x8x1xf32, #tpu.memory_space<vmem>>, vector<4x8x1xf32>
      tpu.vector_store %arg7[%c0_124, %c0_125, %c0_126], %166 {strides = array<i32>} : memref<4x8x1xf32, #tpu.memory_space<vmem>>, vector<4x8x1xf32>,
      %cst_127 = arith.constant 0.000000e+00 : f32
      %168 = vector.broadcast %cst_127 : f32 to vector<4x8x1xf32>
      %c0_128 = arith.constant 0 : index
      %c0_129 = arith.constant 0 : index
      %c0_130 = arith.constant 0 : index
      %169 = vector.load %arg8[%c0_128, %c0_129, %c0_130] : memref<4x8x1xf32, #tpu.memory_space<vmem>>, vector<4x8x1xf32>
      tpu.vector_store %arg8[%c0_128, %c0_129, %c0_130], %168 {strides = array<i32>} : memref<4x8x1xf32, #tpu.memory_space<vmem>>, vector<4x8x1xf32>,
      %cst_131 = arith.constant 0.000000e+00 : f32
      %170 = vector.broadcast %cst_131 : f32 to vector<4x8x32xf32>
      %c0_132 = arith.constant 0 : index
      %c0_133 = arith.constant 0 : index
      %c0_134 = arith.constant 0 : index
      %171 = vector.load %arg9[%c0_132, %c0_133, %c0_134] : memref<4x8x32xf32, #tpu.memory_space<vmem>>, vector<4x8x32xf32>
      tpu.vector_store %arg9[%c0_132, %c0_133, %c0_134], %170 {strides = array<i32>} : memref<4x8x32xf32, #tpu.memory_space<vmem>>, vector<4x8x32xf32>,
    } else {
    }
    %c0 = arith.constant 0 : index
    %c0_1 = arith.constant 0 : index
    %c0_2 = arith.constant 0 : index
    %3 = vector.load %arg3[%c0, %c0_1, %c0_2] : memref<1x8x128xf32, #tpu.memory_space<vmem>>, vector<1x8x32xf32>
    %4 = vector.shape_cast %3 : vector<1x8x32xf32> to vector<8x32xf32>
    %cst = arith.constant 0.176776692 : f32
    %5 = vector.broadcast %cst : f32 to vector<8x32xf32>
    %6 = arith.mulf %4, %5 : vector<8x32xf32>
    %c0_3 = arith.constant 0 : index
    %c0_4 = arith.constant 0 : index
    %c0_5 = arith.constant 0 : index
    %7 = vector.load %arg4[%c0_3, %c0_4, %c0_5] : memref<1x8x128xf32, #tpu.memory_space<vmem>>, vector<1x8x32xf32>
    %8 = vector.shape_cast %7 : vector<1x8x32xf32> to vector<8x32xf32>
    %c0_6 = arith.constant 0 : index
    %c0_7 = arith.constant 0 : index
    %c0_8 = arith.constant 0 : index
    %9 = vector.load %arg5[%c0_6, %c0_7, %c0_8] : memref<1x8x128xf32, #tpu.memory_space<vmem>>, vector<1x8x32xf32>
    %10 = vector.shape_cast %9 : vector<1x8x32xf32> to vector<8x32xf32>
    %cst_9 = arith.constant dense<0.000000e+00> : vector<8x8xf32>
    %11 = tpu.matmul %6, %8, %cst_9 {dimension_numbers = #tpu.dot_dimension_numbers<[1], [1], [0], [0], [0, 0, 1, 0], [], []>} : vector<8x32xf32>, vector<8x32xf32>, vector<8x8xf32> -> vector<8x8xf32>
    %c0_10 = arith.constant 0 : index
    %c0_11 = arith.constant 0 : index
    %c0_12 = arith.constant 0 : index
    %12 = vector.load %arg7[%c0_10, %c0_11, %c0_12] : memref<4x8x1xf32, #tpu.memory_space<vmem>>, vector<1x8x1xf32>
    %13 = vector.shape_cast %12 : vector<1x8x1xf32> to vector<8x1xf32>
    %c0_13 = arith.constant 0 : index
    %c0_14 = arith.constant 0 : index
    %c0_15 = arith.constant 0 : index
    %14 = vector.load %arg8[%c0_13, %c0_14, %c0_15] : memref<4x8x1xf32, #tpu.memory_space<vmem>>, vector<1x8x1xf32>
    %15 = vector.shape_cast %14 : vector<1x8x1xf32> to vector<8x1xf32>
    %cst_16 = arith.constant dense<0xFF800000> : vector<8xf32>
    %16 = vector.multi_reduction <maximumf>, %11, %cst_16 [1] : vector<8x8xf32> to vector<8xf32>
    %17 = vector.shape_cast %16 : vector<8xf32> to vector<8x1xf32>
    %18 = arith.maximumf %13, %17 : vector<8x1xf32>
    %19 = arith.subf %13, %18 : vector<8x1xf32>
    %20 = math.exp %19 : vector<8x1xf32>
    %21 = vector.broadcast %18 : vector<8x1xf32> to vector<8x8xf32>
    %22 = arith.subf %11, %21 : vector<8x8xf32>
    %23 = math.exp %22 : vector<8x8xf32>
    %24 = arith.mulf %20, %15 : vector<8x1xf32>
    %cst_17 = arith.constant dense<0.000000e+00> : vector<8xf32>
    %25 = vector.multi_reduction <add>, %23, %cst_17 [1] : vector<8x8xf32> to vector<8xf32>
    %26 = vector.shape_cast %25 : vector<8xf32> to vector<8x1xf32>
    %27 = arith.addf %24, %26 : vector<8x1xf32>
    %c0_18 = arith.constant 0 : index
    %c0_19 = arith.constant 0 : index
    %c0_20 = arith.constant 0 : index
    %28 = vector.load %arg8[%c0_18, %c0_19, %c0_20] : memref<4x8x1xf32, #tpu.memory_space<vmem>>, vector<1x8x1xf32>
    %29 = vector.shape_cast %28 : vector<1x8x1xf32> to vector<8x1xf32>
    %30 = vector.shape_cast %27 : vector<8x1xf32> to vector<1x8x1xf32>
    tpu.vector_store %arg8[%c0_18, %c0_19, %c0_20], %30 {strides = array<i32>} : memref<4x8x1xf32, #tpu.memory_space<vmem>>, vector<1x8x1xf32>,
    %c0_21 = arith.constant 0 : index
    %c0_22 = arith.constant 0 : index
    %c0_23 = arith.constant 0 : index
    %31 = vector.load %arg9[%c0_21, %c0_22, %c0_23] : memref<4x8x32xf32, #tpu.memory_space<vmem>>, vector<1x8x32xf32>
    %32 = vector.shape_cast %31 : vector<1x8x32xf32> to vector<8x32xf32>
    %33 = vector.broadcast %20 : vector<8x1xf32> to vector<8x32xf32>
    %34 = arith.mulf %33, %32 : vector<8x32xf32>
    %cst_24 = arith.constant dense<0.000000e+00> : vector<8x32xf32>
    %35 = tpu.matmul %23, %10, %cst_24 {dimension_numbers = #tpu.dot_dimension_numbers<[1], [0], [0], [1], [0, 0, 1, 1], [], []>} : vector<8x8xf32>, vector<8x32xf32>, vector<8x32xf32> -> vector<8x32xf32>
    %36 = arith.addf %34, %35 : vector<8x32xf32>
    %c0_25 = arith.constant 0 : index
    %c0_26 = arith.constant 0 : index
    %c0_27 = arith.constant 0 : index
    %37 = vector.load %arg9[%c0_25, %c0_26, %c0_27] : memref<4x8x32xf32, #tpu.memory_space<vmem>>, vector<1x8x32xf32>
    %38 = vector.shape_cast %37 : vector<1x8x32xf32> to vector<8x32xf32>
    %39 = vector.shape_cast %36 : vector<8x32xf32> to vector<1x8x32xf32>
    tpu.vector_store %arg9[%c0_25, %c0_26, %c0_27], %39 {strides = array<i32>} : memref<4x8x32xf32, #tpu.memory_space<vmem>>, vector<1x8x32xf32>,
    %c0_28 = arith.constant 0 : index
    %c0_29 = arith.constant 0 : index
    %c0_30 = arith.constant 0 : index
    %40 = vector.load %arg7[%c0_28, %c0_29, %c0_30] : memref<4x8x1xf32, #tpu.memory_space<vmem>>, vector<1x8x1xf32>
    %41 = vector.shape_cast %40 : vector<1x8x1xf32> to vector<8x1xf32>
    %42 = vector.shape_cast %18 : vector<8x1xf32> to vector<1x8x1xf32>
    tpu.vector_store %arg7[%c0_28, %c0_29, %c0_30], %42 {strides = array<i32>} : memref<4x8x1xf32, #tpu.memory_space<vmem>>, vector<1x8x1xf32>,
    %c0_31 = arith.constant 0 : index
    %c0_32 = arith.constant 0 : index
    %c32 = arith.constant 32 : index
    %43 = vector.load %arg3[%c0_31, %c0_32, %c32] : memref<1x8x128xf32, #tpu.memory_space<vmem>>, vector<1x8x32xf32>
    %44 = vector.shape_cast %43 : vector<1x8x32xf32> to vector<8x32xf32>
    %cst_33 = arith.constant 0.176776692 : f32
    %45 = vector.broadcast %cst_33 : f32 to vector<8x32xf32>
    %46 = arith.mulf %44, %45 : vector<8x32xf32>
    %c0_34 = arith.constant 0 : index
    %c0_35 = arith.constant 0 : index
    %c32_36 = arith.constant 32 : index
    %47 = vector.load %arg4[%c0_34, %c0_35, %c32_36] : memref<1x8x128xf32, #tpu.memory_space<vmem>>, vector<1x8x32xf32>
    %48 = vector.shape_cast %47 : vector<1x8x32xf32> to vector<8x32xf32>
    %c0_37 = arith.constant 0 : index
    %c0_38 = arith.constant 0 : index
    %c32_39 = arith.constant 32 : index
    %49 = vector.load %arg5[%c0_37, %c0_38, %c32_39] : memref<1x8x128xf32, #tpu.memory_space<vmem>>, vector<1x8x32xf32>
    %50 = vector.shape_cast %49 : vector<1x8x32xf32> to vector<8x32xf32>
    %cst_40 = arith.constant dense<0.000000e+00> : vector<8x8xf32>
    %51 = tpu.matmul %46, %48, %cst_40 {dimension_numbers = #tpu.dot_dimension_numbers<[1], [1], [0], [0], [0, 0, 1, 0], [], []>} : vector<8x32xf32>, vector<8x32xf32>, vector<8x8xf32> -> vector<8x8xf32>
    %c1 = arith.constant 1 : index
    %c0_41 = arith.constant 0 : index
    %c0_42 = arith.constant 0 : index
    %52 = vector.load %arg7[%c1, %c0_41, %c0_42] : memref<4x8x1xf32, #tpu.memory_space<vmem>>, vector<1x8x1xf32>
    %53 = vector.shape_cast %52 : vector<1x8x1xf32> to vector<8x1xf32>
    %c1_43 = arith.constant 1 : index
    %c0_44 = arith.constant 0 : index
    %c0_45 = arith.constant 0 : index
    %54 = vector.load %arg8[%c1_43, %c0_44, %c0_45] : memref<4x8x1xf32, #tpu.memory_space<vmem>>, vector<1x8x1xf32>
    %55 = vector.shape_cast %54 : vector<1x8x1xf32> to vector<8x1xf32>
    %cst_46 = arith.constant dense<0xFF800000> : vector<8xf32>
    %56 = vector.multi_reduction <maximumf>, %51, %cst_46 [1] : vector<8x8xf32> to vector<8xf32>
    %57 = vector.shape_cast %56 : vector<8xf32> to vector<8x1xf32>
    %58 = arith.maximumf %53, %57 : vector<8x1xf32>
    %59 = arith.subf %53, %58 : vector<8x1xf32>
    %60 = math.exp %59 : vector<8x1xf32>
    %61 = vector.broadcast %58 : vector<8x1xf32> to vector<8x8xf32>
    %62 = arith.subf %51, %61 : vector<8x8xf32>
    %63 = math.exp %62 : vector<8x8xf32>
    %64 = arith.mulf %60, %55 : vector<8x1xf32>
    %cst_47 = arith.constant dense<0.000000e+00> : vector<8xf32>
    %65 = vector.multi_reduction <add>, %63, %cst_47 [1] : vector<8x8xf32> to vector<8xf32>
    %66 = vector.shape_cast %65 : vector<8xf32> to vector<8x1xf32>
    %67 = arith.addf %64, %66 : vector<8x1xf32>
    %c1_48 = arith.constant 1 : index
    %c0_49 = arith.constant 0 : index
    %c0_50 = arith.constant 0 : index
    %68 = vector.load %arg8[%c1_48, %c0_49, %c0_50] : memref<4x8x1xf32, #tpu.memory_space<vmem>>, vector<1x8x1xf32>
    %69 = vector.shape_cast %68 : vector<1x8x1xf32> to vector<8x1xf32>
    %70 = vector.shape_cast %67 : vector<8x1xf32> to vector<1x8x1xf32>
    tpu.vector_store %arg8[%c1_48, %c0_49, %c0_50], %70 {strides = array<i32>} : memref<4x8x1xf32, #tpu.memory_space<vmem>>, vector<1x8x1xf32>,
    %c1_51 = arith.constant 1 : index
    %c0_52 = arith.constant 0 : index
    %c0_53 = arith.constant 0 : index
    %71 = vector.load %arg9[%c1_51, %c0_52, %c0_53] : memref<4x8x32xf32, #tpu.memory_space<vmem>>, vector<1x8x32xf32>
    %72 = vector.shape_cast %71 : vector<1x8x32xf32> to vector<8x32xf32>
    %73 = vector.broadcast %60 : vector<8x1xf32> to vector<8x32xf32>
    %74 = arith.mulf %73, %72 : vector<8x32xf32>
    %cst_54 = arith.constant dense<0.000000e+00> : vector<8x32xf32>
    %75 = tpu.matmul %63, %50, %cst_54 {dimension_numbers = #tpu.dot_dimension_numbers<[1], [0], [0], [1], [0, 0, 1, 1], [], []>} : vector<8x8xf32>, vector<8x32xf32>, vector<8x32xf32> -> vector<8x32xf32>
    %76 = arith.addf %74, %75 : vector<8x32xf32>
    %c1_55 = arith.constant 1 : index
    %c0_56 = arith.constant 0 : index
    %c0_57 = arith.constant 0 : index
    %77 = vector.load %arg9[%c1_55, %c0_56, %c0_57] : memref<4x8x32xf32, #tpu.memory_space<vmem>>, vector<1x8x32xf32>
    %78 = vector.shape_cast %77 : vector<1x8x32xf32> to vector<8x32xf32>
    %79 = vector.shape_cast %76 : vector<8x32xf32> to vector<1x8x32xf32>
    tpu.vector_store %arg9[%c1_55, %c0_56, %c0_57], %79 {strides = array<i32>} : memref<4x8x32xf32, #tpu.memory_space<vmem>>, vector<1x8x32xf32>,
    %c1_58 = arith.constant 1 : index
    %c0_59 = arith.constant 0 : index
    %c0_60 = arith.constant 0 : index
    %80 = vector.load %arg7[%c1_58, %c0_59, %c0_60] : memref<4x8x1xf32, #tpu.memory_space<vmem>>, vector<1x8x1xf32>
    %81 = vector.shape_cast %80 : vector<1x8x1xf32> to vector<8x1xf32>
    %82 = vector.shape_cast %58 : vector<8x1xf32> to vector<1x8x1xf32>
    tpu.vector_store %arg7[%c1_58, %c0_59, %c0_60], %82 {strides = array<i32>} : memref<4x8x1xf32, #tpu.memory_space<vmem>>, vector<1x8x1xf32>,
    %c0_61 = arith.constant 0 : index
    %c0_62 = arith.constant 0 : index
    %c64 = arith.constant 64 : index
    %83 = vector.load %arg3[%c0_61, %c0_62, %c64] : memref<1x8x128xf32, #tpu.memory_space<vmem>>, vector<1x8x32xf32>
    %84 = vector.shape_cast %83 : vector<1x8x32xf32> to vector<8x32xf32>
    %cst_63 = arith.constant 0.176776692 : f32
    %85 = vector.broadcast %cst_63 : f32 to vector<8x32xf32>
    %86 = arith.mulf %84, %85 : vector<8x32xf32>
    %c0_64 = arith.constant 0 : index
    %c0_65 = arith.constant 0 : index
    %c64_66 = arith.constant 64 : index
    %87 = vector.load %arg4[%c0_64, %c0_65, %c64_66] : memref<1x8x128xf32, #tpu.memory_space<vmem>>, vector<1x8x32xf32>
    %88 = vector.shape_cast %87 : vector<1x8x32xf32> to vector<8x32xf32>
    %c0_67 = arith.constant 0 : index
    %c0_68 = arith.constant 0 : index
    %c64_69 = arith.constant 64 : index
    %89 = vector.load %arg5[%c0_67, %c0_68, %c64_69] : memref<1x8x128xf32, #tpu.memory_space<vmem>>, vector<1x8x32xf32>
    %90 = vector.shape_cast %89 : vector<1x8x32xf32> to vector<8x32xf32>
    %cst_70 = arith.constant dense<0.000000e+00> : vector<8x8xf32>
    %91 = tpu.matmul %86, %88, %cst_70 {dimension_numbers = #tpu.dot_dimension_numbers<[1], [1], [0], [0], [0, 0, 1, 0], [], []>} : vector<8x32xf32>, vector<8x32xf32>, vector<8x8xf32> -> vector<8x8xf32>
    %c2 = arith.constant 2 : index
    %c0_71 = arith.constant 0 : index
    %c0_72 = arith.constant 0 : index
    %92 = vector.load %arg7[%c2, %c0_71, %c0_72] : memref<4x8x1xf32, #tpu.memory_space<vmem>>, vector<1x8x1xf32>
    %93 = vector.shape_cast %92 : vector<1x8x1xf32> to vector<8x1xf32>
    %c2_73 = arith.constant 2 : index
    %c0_74 = arith.constant 0 : index
    %c0_75 = arith.constant 0 : index
    %94 = vector.load %arg8[%c2_73, %c0_74, %c0_75] : memref<4x8x1xf32, #tpu.memory_space<vmem>>, vector<1x8x1xf32>
    %95 = vector.shape_cast %94 : vector<1x8x1xf32> to vector<8x1xf32>
    %cst_76 = arith.constant dense<0xFF800000> : vector<8xf32>
    %96 = vector.multi_reduction <maximumf>, %91, %cst_76 [1] : vector<8x8xf32> to vector<8xf32>
    %97 = vector.shape_cast %96 : vector<8xf32> to vector<8x1xf32>
    %98 = arith.maximumf %93, %97 : vector<8x1xf32>
    %99 = arith.subf %93, %98 : vector<8x1xf32>
    %100 = math.exp %99 : vector<8x1xf32>
    %101 = vector.broadcast %98 : vector<8x1xf32> to vector<8x8xf32>
    %102 = arith.subf %91, %101 : vector<8x8xf32>
    %103 = math.exp %102 : vector<8x8xf32>
    %104 = arith.mulf %100, %95 : vector<8x1xf32>
    %cst_77 = arith.constant dense<0.000000e+00> : vector<8xf32>
    %105 = vector.multi_reduction <add>, %103, %cst_77 [1] : vector<8x8xf32> to vector<8xf32>
    %106 = vector.shape_cast %105 : vector<8xf32> to vector<8x1xf32>
    %107 = arith.addf %104, %106 : vector<8x1xf32>
    %c2_78 = arith.constant 2 : index
    %c0_79 = arith.constant 0 : index
    %c0_80 = arith.constant 0 : index
    %108 = vector.load %arg8[%c2_78, %c0_79, %c0_80] : memref<4x8x1xf32, #tpu.memory_space<vmem>>, vector<1x8x1xf32>
    %109 = vector.shape_cast %108 : vector<1x8x1xf32> to vector<8x1xf32>
    %110 = vector.shape_cast %107 : vector<8x1xf32> to vector<1x8x1xf32>
    tpu.vector_store %arg8[%c2_78, %c0_79, %c0_80], %110 {strides = array<i32>} : memref<4x8x1xf32, #tpu.memory_space<vmem>>, vector<1x8x1xf32>,
    %c2_81 = arith.constant 2 : index
    %c0_82 = arith.constant 0 : index
    %c0_83 = arith.constant 0 : index
    %111 = vector.load %arg9[%c2_81, %c0_82, %c0_83] : memref<4x8x32xf32, #tpu.memory_space<vmem>>, vector<1x8x32xf32>
    %112 = vector.shape_cast %111 : vector<1x8x32xf32> to vector<8x32xf32>
    %113 = vector.broadcast %100 : vector<8x1xf32> to vector<8x32xf32>
    %114 = arith.mulf %113, %112 : vector<8x32xf32>
    %cst_84 = arith.constant dense<0.000000e+00> : vector<8x32xf32>
    %115 = tpu.matmul %103, %90, %cst_84 {dimension_numbers = #tpu.dot_dimension_numbers<[1], [0], [0], [1], [0, 0, 1, 1], [], []>} : vector<8x8xf32>, vector<8x32xf32>, vector<8x32xf32> -> vector<8x32xf32>
    %116 = arith.addf %114, %115 : vector<8x32xf32>
    %c2_85 = arith.constant 2 : index
    %c0_86 = arith.constant 0 : index
    %c0_87 = arith.constant 0 : index
    %117 = vector.load %arg9[%c2_85, %c0_86, %c0_87] : memref<4x8x32xf32, #tpu.memory_space<vmem>>, vector<1x8x32xf32>
    %118 = vector.shape_cast %117 : vector<1x8x32xf32> to vector<8x32xf32>
    %119 = vector.shape_cast %116 : vector<8x32xf32> to vector<1x8x32xf32>
    tpu.vector_store %arg9[%c2_85, %c0_86, %c0_87], %119 {strides = array<i32>} : memref<4x8x32xf32, #tpu.memory_space<vmem>>, vector<1x8x32xf32>,
    %c2_88 = arith.constant 2 : index
    %c0_89 = arith.constant 0 : index
    %c0_90 = arith.constant 0 : index
    %120 = vector.load %arg7[%c2_88, %c0_89, %c0_90] : memref<4x8x1xf32, #tpu.memory_space<vmem>>, vector<1x8x1xf32>
    %121 = vector.shape_cast %120 : vector<1x8x1xf32> to vector<8x1xf32>
    %122 = vector.shape_cast %98 : vector<8x1xf32> to vector<1x8x1xf32>
    tpu.vector_store %arg7[%c2_88, %c0_89, %c0_90], %122 {strides = array<i32>} : memref<4x8x1xf32, #tpu.memory_space<vmem>>, vector<1x8x1xf32>,
    %c0_91 = arith.constant 0 : index
    %c0_92 = arith.constant 0 : index
    %c96 = arith.constant 96 : index
    %123 = vector.load %arg3[%c0_91, %c0_92, %c96] : memref<1x8x128xf32, #tpu.memory_space<vmem>>, vector<1x8x32xf32>
    %124 = vector.shape_cast %123 : vector<1x8x32xf32> to vector<8x32xf32>
    %cst_93 = arith.constant 0.176776692 : f32
    %125 = vector.broadcast %cst_93 : f32 to vector<8x32xf32>
    %126 = arith.mulf %124, %125 : vector<8x32xf32>
    %c0_94 = arith.constant 0 : index
    %c0_95 = arith.constant 0 : index
    %c96_96 = arith.constant 96 : index
    %127 = vector.load %arg4[%c0_94, %c0_95, %c96_96] : memref<1x8x128xf32, #tpu.memory_space<vmem>>, vector<1x8x32xf32>
    %128 = vector.shape_cast %127 : vector<1x8x32xf32> to vector<8x32xf32>
    %c0_97 = arith.constant 0 : index
    %c0_98 = arith.constant 0 : index
    %c96_99 = arith.constant 96 : index
    %129 = vector.load %arg5[%c0_97, %c0_98, %c96_99] : memref<1x8x128xf32, #tpu.memory_space<vmem>>, vector<1x8x32xf32>
    %130 = vector.shape_cast %129 : vector<1x8x32xf32> to vector<8x32xf32>
    %cst_100 = arith.constant dense<0.000000e+00> : vector<8x8xf32>
    %131 = tpu.matmul %126, %128, %cst_100 {dimension_numbers = #tpu.dot_dimension_numbers<[1], [1], [0], [0], [0, 0, 1, 0], [], []>} : vector<8x32xf32>, vector<8x32xf32>, vector<8x8xf32> -> vector<8x8xf32>
    %c3 = arith.constant 3 : index
    %c0_101 = arith.constant 0 : index
    %c0_102 = arith.constant 0 : index
    %132 = vector.load %arg7[%c3, %c0_101, %c0_102] : memref<4x8x1xf32, #tpu.memory_space<vmem>>, vector<1x8x1xf32>
    %133 = vector.shape_cast %132 : vector<1x8x1xf32> to vector<8x1xf32>
    %c3_103 = arith.constant 3 : index
    %c0_104 = arith.constant 0 : index
    %c0_105 = arith.constant 0 : index
    %134 = vector.load %arg8[%c3_103, %c0_104, %c0_105] : memref<4x8x1xf32, #tpu.memory_space<vmem>>, vector<1x8x1xf32>
    %135 = vector.shape_cast %134 : vector<1x8x1xf32> to vector<8x1xf32>
    %cst_106 = arith.constant dense<0xFF800000> : vector<8xf32>
    %136 = vector.multi_reduction <maximumf>, %131, %cst_106 [1] : vector<8x8xf32> to vector<8xf32>
    %137 = vector.shape_cast %136 : vector<8xf32> to vector<8x1xf32>
    %138 = arith.maximumf %133, %137 : vector<8x1xf32>
    %139 = arith.subf %133, %138 : vector<8x1xf32>
    %140 = math.exp %139 : vector<8x1xf32>
    %141 = vector.broadcast %138 : vector<8x1xf32> to vector<8x8xf32>
    %142 = arith.subf %131, %141 : vector<8x8xf32>
    %143 = math.exp %142 : vector<8x8xf32>
    %144 = arith.mulf %140, %135 : vector<8x1xf32>
    %cst_107 = arith.constant dense<0.000000e+00> : vector<8xf32>
    %145 = vector.multi_reduction <add>, %143, %cst_107 [1] : vector<8x8xf32> to vector<8xf32>
    %146 = vector.shape_cast %145 : vector<8xf32> to vector<8x1xf32>
    %147 = arith.addf %144, %146 : vector<8x1xf32>
    %c3_108 = arith.constant 3 : index
    %c0_109 = arith.constant 0 : index
    %c0_110 = arith.constant 0 : index
    %148 = vector.load %arg8[%c3_108, %c0_109, %c0_110] : memref<4x8x1xf32, #tpu.memory_space<vmem>>, vector<1x8x1xf32>
    %149 = vector.shape_cast %148 : vector<1x8x1xf32> to vector<8x1xf32>
    %150 = vector.shape_cast %147 : vector<8x1xf32> to vector<1x8x1xf32>
    tpu.vector_store %arg8[%c3_108, %c0_109, %c0_110], %150 {strides = array<i32>} : memref<4x8x1xf32, #tpu.memory_space<vmem>>, vector<1x8x1xf32>,
    %c3_111 = arith.constant 3 : index
    %c0_112 = arith.constant 0 : index
    %c0_113 = arith.constant 0 : index
    %151 = vector.load %arg9[%c3_111, %c0_112, %c0_113] : memref<4x8x32xf32, #tpu.memory_space<vmem>>, vector<1x8x32xf32>
    %152 = vector.shape_cast %151 : vector<1x8x32xf32> to vector<8x32xf32>
    %153 = vector.broadcast %140 : vector<8x1xf32> to vector<8x32xf32>
    %154 = arith.mulf %153, %152 : vector<8x32xf32>
    %cst_114 = arith.constant dense<0.000000e+00> : vector<8x32xf32>
    %155 = tpu.matmul %143, %130, %cst_114 {dimension_numbers = #tpu.dot_dimension_numbers<[1], [0], [0], [1], [0, 0, 1, 1], [], []>} : vector<8x8xf32>, vector<8x32xf32>, vector<8x32xf32> -> vector<8x32xf32>
    %156 = arith.addf %154, %155 : vector<8x32xf32>
    %c3_115 = arith.constant 3 : index
    %c0_116 = arith.constant 0 : index
    %c0_117 = arith.constant 0 : index
    %157 = vector.load %arg9[%c3_115, %c0_116, %c0_117] : memref<4x8x32xf32, #tpu.memory_space<vmem>>, vector<1x8x32xf32>
    %158 = vector.shape_cast %157 : vector<1x8x32xf32> to vector<8x32xf32>
    %159 = vector.shape_cast %156 : vector<8x32xf32> to vector<1x8x32xf32>
    tpu.vector_store %arg9[%c3_115, %c0_116, %c0_117], %159 {strides = array<i32>} : memref<4x8x32xf32, #tpu.memory_space<vmem>>, vector<1x8x32xf32>,
    %c3_118 = arith.constant 3 : index
    %c0_119 = arith.constant 0 : index
    %c0_120 = arith.constant 0 : index
    %160 = vector.load %arg7[%c3_118, %c0_119, %c0_120] : memref<4x8x1xf32, #tpu.memory_space<vmem>>, vector<1x8x1xf32>
    %161 = vector.shape_cast %160 : vector<1x8x1xf32> to vector<8x1xf32>
    %162 = vector.shape_cast %138 : vector<8x1xf32> to vector<1x8x1xf32>
    tpu.vector_store %arg7[%c3_118, %c0_119, %c0_120], %162 {strides = array<i32>} : memref<4x8x1xf32, #tpu.memory_space<vmem>>, vector<1x8x1xf32>,
    %c0_i32_121 = arith.constant 0 : i32
    %163 = arith.cmpi eq, %arg2, %c0_i32_121 : i32
    %164 = arith.extui %163 : i1 to i32
    %c0_i32_122 = arith.constant 0 : i32
    %165 = arith.cmpi ne, %164, %c0_i32_122 : i32
    scf.if %165 {
      %c0_123 = arith.constant 0 : index
      %c0_124 = arith.constant 0 : index
      %c0_125 = arith.constant 0 : index
      %166 = vector.load %arg8[%c0_123, %c0_124, %c0_125] : memref<4x8x1xf32, #tpu.memory_space<vmem>>, vector<1x8x1xf32>
      %167 = vector.shape_cast %166 : vector<1x8x1xf32> to vector<8x1xf32>
      %168 = tpu.reciprocal %167 {approx = true} : vector<8x1xf32> -> vector<8x1xf32>
      %c0_126 = arith.constant 0 : index
      %c0_127 = arith.constant 0 : index
      %c0_128 = arith.constant 0 : index
      %169 = vector.load %arg9[%c0_126, %c0_127, %c0_128] : memref<4x8x32xf32, #tpu.memory_space<vmem>>, vector<1x8x32xf32>
      %170 = vector.shape_cast %169 : vector<1x8x32xf32> to vector<8x32xf32>
      %171 = vector.broadcast %168 : vector<8x1xf32> to vector<8x32xf32>
      %172 = arith.mulf %170, %171 : vector<8x32xf32>
      %c0_129 = arith.constant 0 : index
      %c0_130 = arith.constant 0 : index
      %c0_131 = arith.constant 0 : index
      %173 = vector.load %arg6[%c0_129, %c0_130, %c0_131] : memref<1x8x128xf32, #tpu.memory_space<vmem>>, vector<1x8x32xf32>
      %174 = vector.shape_cast %173 : vector<1x8x32xf32> to vector<8x32xf32>
      %175 = vector.shape_cast %172 : vector<8x32xf32> to vector<1x8x32xf32>
      tpu.vector_store %arg6[%c0_129, %c0_130, %c0_131], %175 {strides = array<i32>} : memref<1x8x128xf32, #tpu.memory_space<vmem>>, vector<1x8x32xf32>,
      %c1_132 = arith.constant 1 : index
      %c0_133 = arith.constant 0 : index
      %c0_134 = arith.constant 0 : index
      %176 = vector.load %arg8[%c1_132, %c0_133, %c0_134] : memref<4x8x1xf32, #tpu.memory_space<vmem>>, vector<1x8x1xf32>
      %177 = vector.shape_cast %176 : vector<1x8x1xf32> to vector<8x1xf32>
      %178 = tpu.reciprocal %177 {approx = true} : vector<8x1xf32> -> vector<8x1xf32>
      %c1_135 = arith.constant 1 : index
      %c0_136 = arith.constant 0 : index
      %c0_137 = arith.constant 0 : index
      %179 = vector.load %arg9[%c1_135, %c0_136, %c0_137] : memref<4x8x32xf32, #tpu.memory_space<vmem>>, vector<1x8x32xf32>
      %180 = vector.shape_cast %179 : vector<1x8x32xf32> to vector<8x32xf32>
      %181 = vector.broadcast %178 : vector<8x1xf32> to vector<8x32xf32>
      %182 = arith.mulf %180, %181 : vector<8x32xf32>
      %c0_138 = arith.constant 0 : index
      %c0_139 = arith.constant 0 : index
      %c32_140 = arith.constant 32 : index
      %183 = vector.load %arg6[%c0_138, %c0_139, %c32_140] : memref<1x8x128xf32, #tpu.memory_space<vmem>>, vector<1x8x32xf32>
      %184 = vector.shape_cast %183 : vector<1x8x32xf32> to vector<8x32xf32>
      %185 = vector.shape_cast %182 : vector<8x32xf32> to vector<1x8x32xf32>
      tpu.vector_store %arg6[%c0_138, %c0_139, %c32_140], %185 {strides = array<i32>} : memref<1x8x128xf32, #tpu.memory_space<vmem>>, vector<1x8x32xf32>,
      %c2_141 = arith.constant 2 : index
      %c0_142 = arith.constant 0 : index
      %c0_143 = arith.constant 0 : index
      %186 = vector.load %arg8[%c2_141, %c0_142, %c0_143] : memref<4x8x1xf32, #tpu.memory_space<vmem>>, vector<1x8x1xf32>
      %187 = vector.shape_cast %186 : vector<1x8x1xf32> to vector<8x1xf32>
      %188 = tpu.reciprocal %187 {approx = true} : vector<8x1xf32> -> vector<8x1xf32>
      %c2_144 = arith.constant 2 : index
      %c0_145 = arith.constant 0 : index
      %c0_146 = arith.constant 0 : index
      %189 = vector.load %arg9[%c2_144, %c0_145, %c0_146] : memref<4x8x32xf32, #tpu.memory_space<vmem>>, vector<1x8x32xf32>
      %190 = vector.shape_cast %189 : vector<1x8x32xf32> to vector<8x32xf32>
      %191 = vector.broadcast %188 : vector<8x1xf32> to vector<8x32xf32>
      %192 = arith.mulf %190, %191 : vector<8x32xf32>
      %c0_147 = arith.constant 0 : index
      %c0_148 = arith.constant 0 : index
      %c64_149 = arith.constant 64 : index
      %193 = vector.load %arg6[%c0_147, %c0_148, %c64_149] : memref<1x8x128xf32, #tpu.memory_space<vmem>>, vector<1x8x32xf32>
      %194 = vector.shape_cast %193 : vector<1x8x32xf32> to vector<8x32xf32>
      %195 = vector.shape_cast %192 : vector<8x32xf32> to vector<1x8x32xf32>
      tpu.vector_store %arg6[%c0_147, %c0_148, %c64_149], %195 {strides = array<i32>} : memref<1x8x128xf32, #tpu.memory_space<vmem>>, vector<1x8x32xf32>,
      %c3_150 = arith.constant 3 : index
      %c0_151 = arith.constant 0 : index
      %c0_152 = arith.constant 0 : index
      %196 = vector.load %arg8[%c3_150, %c0_151, %c0_152] : memref<4x8x1xf32, #tpu.memory_space<vmem>>, vector<1x8x1xf32>
      %197 = vector.shape_cast %196 : vector<1x8x1xf32> to vector<8x1xf32>
      %198 = tpu.reciprocal %197 {approx = true} : vector<8x1xf32> -> vector<8x1xf32>
      %c3_153 = arith.constant 3 : index
      %c0_154 = arith.constant 0 : index
      %c0_155 = arith.constant 0 : index
      %199 = vector.load %arg9[%c3_153, %c0_154, %c0_155] : memref<4x8x32xf32, #tpu.memory_space<vmem>>, vector<1x8x32xf32>
      %200 = vector.shape_cast %199 : vector<1x8x32xf32> to vector<8x32xf32>
      %201 = vector.broadcast %198 : vector<8x1xf32> to vector<8x32xf32>
      %202 = arith.mulf %200, %201 : vector<8x32xf32>
      %c0_156 = arith.constant 0 : index
      %c0_157 = arith.constant 0 : index
      %c96_158 = arith.constant 96 : index
      %203 = vector.load %arg6[%c0_156, %c0_157, %c96_158] : memref<1x8x128xf32, #tpu.memory_space<vmem>>, vector<1x8x32xf32>
      %204 = vector.shape_cast %203 : vector<1x8x32xf32> to vector<8x32xf32>
      %205 = vector.shape_cast %202 : vector<8x32xf32> to vector<1x8x32xf32>
      tpu.vector_store %arg6[%c0_156, %c0_157, %c96_158], %205 {strides = array<i32>} : memref<1x8x128xf32, #tpu.memory_space<vmem>>, vector<1x8x32xf32>,
    } else {
    }
    return
  }
  func.func @transform_0(%arg0: i32, %arg1: i32, %arg2: i32) -> (i32, i32, i32) {
    %c0_i32 = arith.constant 0 : i32
    %c0_i32_0 = arith.constant 0 : i32
    return %arg0, %arg1, %c0_i32 : i32, i32, i32
  }
  func.func @transform_1(%arg0: i32, %arg1: i32, %arg2: i32) -> (i32, i32, i32) {
    %c0_i32 = arith.constant 0 : i32
    %c0_i32_0 = arith.constant 0 : i32
    return %arg0, %arg2, %c0_i32 : i32, i32, i32
  }
  func.func @transform_2(%arg0: i32, %arg1: i32, %arg2: i32) -> (i32, i32, i32) {
    %c0_i32 = arith.constant 0 : i32
    %c0_i32_0 = arith.constant 0 : i32
    return %arg0, %arg2, %c0_i32 : i32, i32, i32
  }
  func.func @transform_3(%arg0: i32, %arg1: i32, %arg2: i32) -> (i32, i32, i32) {
    %c0_i32 = arith.constant 0 : i32
    %c0_i32_0 = arith.constant 0 : i32
    return %arg0, %arg1, %c0_i32 : i32, i32, i32
  }
}

</mosaic_0001>

<llo_original>
// kernel: tpu_custom_call.1
$region0: #{tpu_custom_call.1}
  #allocation0 [shape = 'u32[]', space=smem, size = 0x4, offset = 0x4, fixed_abs, tag = 'smem constant byte address 0x4 - core index']
  #allocation1 [shape = 'u32[144,128]{1,0:T(1,128)}', space=vmem, size = 0x12000, scoped, tag = 'internal scratch']
  #allocation2 [shape = 'f32[4,8,1]{2,1,0:T(8,128)}', space=vmem, size = 0x4000, scoped, tag = 'scratch operand']
  #allocation3 [shape = 'f32[4,8,1]{2,1,0:T(8,128)}', space=vmem, size = 0x4000, scoped, tag = 'scratch operand']
  #allocation4 [shape = 'f32[4,8,32]{2,1,0:T(8,128)}', space=vmem, size = 0x4000, scoped, tag = 'scratch operand']
  %s0 = inlined_call_operand.hbm [shape: f32[2,8,128], index: 0, kind: input, shape index: {}]
  %s1 = inlined_call_operand.hbm [shape: f32[2,8,128], index: 1, kind: input, shape index: {}]
  %s2 = inlined_call_operand.hbm [shape: f32[2,8,128], index: 2, kind: input, shape index: {}]
  %s3 = inlined_call_operand.hbm [shape: f32[2,8,128], index: 3, kind: output, shape index: {}]
  %s4 = sld [smem:[#allocation0]]
  $region65: #{tpu_custom_call.1} parent=0
    _
  %s6 = ssub.s32 1, %s4
  %s7 = scalar_select 0, %s6, %s4
  $region1: #{tpu_custom_call.1} parent=0
    #allocation5 [shape = 'u8[8192]{0}', space=vmem, size = 0x2000, scoped, tag = 'input window, operand 0']
    #allocation6 [shape = 's32[2]{0}', space=sflag, size = 0x8, scoped, tag = 'scoped memory for tpu_custom_call.1']
    #allocation7 [shape = 's32[2]{0}', space=sflag, size = 0x8, scoped, tag = 'scoped memory for tpu_custom_call.1']
    #allocation8 [shape = 'u8[8192]{0}', space=vmem, size = 0x2000, scoped, tag = 'input window, operand 1']
    #allocation9 [shape = 's32[2]{0}', space=sflag, size = 0x8, scoped, tag = 'scoped memory for tpu_custom_call.1']
    #allocation10 [shape = 'u8[8192]{0}', space=vmem, size = 0x2000, scoped, tag = 'input window, operand 2']
    #allocation11 [shape = 'u8[8192]{0}', space=vmem, size = 0x2000, scoped, tag = 'output window, operand 0']
    %8 = vsyncpa [#allocation6], 0
    %s9 = scalar_lea.sflag [#allocation6], 1
    %10 = vsyncpa %s9, 0
    %11 = vsyncpa [#allocation9], 0
    %s12 = scalar_lea.sflag [#allocation9], 1
    %13 = vsyncpa %s12, 0
    %14 = vsyncpa [#allocation7], 0
    %s15 = scalar_lea.sflag [#allocation7], 1
    %16 = vsyncpa %s15, 0
    loop: start=0, step=1, limit=4
    $region2: #{tpu_custom_call.1} parent=1 // loop_pre_header
      _
    $region3: #{tpu_custom_call.1} parent=1 // loop_header
      %s18 = sphi 0, %s22
      %p19 = scmp.ge.s32.totalorder %s18, 4
      %s25 = sphi 0, %s44
      %s26 = sphi 0, %s40
      %s27 = sphi 0, %s36
      %s28 = sphi 0, %s25
      %s29 = sphi 0, %s26
      %s30 = sphi 0, %s27
      %s31 = sphi 0, %s28
      %s32 = sphi 0, %s29
      %s33 = sphi 0, %s30
      %s49 = sphi 0, %s51
      %s52 = sphi 0, %s49
      %s53 = sphi 0, %s52
      %s69 = sphi 0, %s53
      %s77 = sphi 0, %s79
      %s80 = sphi 0, %s77
      %s81 = sphi 0, %s80
      %s97 = sphi 0, %s81
      %s105 = sphi 0, %s107
      %s108 = sphi 0, %s105
      %s109 = sphi 0, %s108
      %s125 = sphi 0, %s109
      %s133 = sphi 0, %s135
      %s136 = sphi 0, %s133
      %s137 = sphi 0, %s136
      %s153 = sphi 0, %s137
    $region4: #{tpu_custom_call.1} parent=1 // loop_header_branch
      %21 = sbr.rel (%p19) target = $region8
    $region5: #{tpu_custom_call.1} parent=1 // loop_body
      %s23 = ssub.s32 %s18, 1
      %s24 = ssub.s32 %s18, 2
      %s34 = sadd.s32 1, %s27
      %p35 = scmp.ge.s32.totalorder %s34, 1
      %s36 = scalar_select %p35, 0, %s34
      %s37 = sadd.s32 1, %s26
      %s38 = scalar_select %p35, %s37, %s26
      %p39 = scmp.ge.s32.totalorder %s38, 1
      %s40 = scalar_select %p39, 0, %s38
      %s41 = sadd.s32 1, %s25
      %s42 = scalar_select %p39, %s41, %s25
      %p43 = scmp.ge.s32.totalorder %s42, 2
      %s44 = scalar_select %p43, 0, %s42
      %s45 = ssub.s32 %s25, %s44
      %s46 = ssub.s32 %s26, %s40
      %s47 = sor.u32 %s45, %s46
      %p48 = scmp.eq.s32.totalorder %s47, 0
      %s50 = sadd.s32 %s49, 1
      %s51 = scalar_select %p48, %s49, %s50
      %p54 = pneg %p48
      %p55 = scmp.eq.s32.totalorder %s18, 1
      %p56 = por %p54, %p55
      %p57 = scmp.ne.s32.totalorder %s49, %s52
      %p58 = scmp.eq.s32.totalorder %s18, 0
      %p59 = por %p57, %p58
      %p60 = scmp.ne.s32.totalorder %s49, %s52
      %p61 = scmp.eq.s32.totalorder %s23, 1
      %p62 = por %p60, %p61
      %p63 = scmp.ne.s32.totalorder %s52, %s53
      %p64 = scmp.eq.s32.totalorder %s23, 0
      %p65 = por %p63, %p64
      %p66 = scmp.ne.s32.totalorder %s52, %s53
      %p67 = scmp.eq.s32.totalorder %s24, 1
      %p68 = por %p66, %p67
      %p70 = scmp.ne.s32.totalorder %s53, %s69
      %p71 = scmp.eq.s32.totalorder %s24, 0
      %p72 = por %p70, %p71
      %s73 = ssub.s32 %s25, %s44
      %s74 = ssub.s32 %s27, %s36
      %s75 = sor.u32 %s73, %s74
      %p76 = scmp.eq.s32.totalorder %s75, 0
      %s78 = sadd.s32 %s77, 1
      %s79 = scalar_select %p76, %s77, %s78
      %p82 = pneg %p76
      %p83 = scmp.eq.s32.totalorder %s18, 1
      %p84 = por %p82, %p83
      %p85 = scmp.ne.s32.totalorder %s77, %s80
      %p86 = scmp.eq.s32.totalorder %s18, 0
      %p87 = por %p85, %p86
      %p88 = scmp.ne.s32.totalorder %s77, %s80
      %p89 = scmp.eq.s32.totalorder %s23, 1
      %p90 = por %p88, %p89
      %p91 = scmp.ne.s32.totalorder %s80, %s81
      %p92 = scmp.eq.s32.totalorder %s23, 0
      %p93 = por %p91, %p92
      %p94 = scmp.ne.s32.totalorder %s80, %s81
      %p95 = scmp.eq.s32.totalorder %s24, 1
      %p96 = por %p94, %p95
      %p98 = scmp.ne.s32.totalorder %s81, %s97
      %p99 = scmp.eq.s32.totalorder %s24, 0
      %p100 = por %p98, %p99
      %s101 = ssub.s32 %s25, %s44
      %s102 = ssub.s32 %s27, %s36
      %s103 = sor.u32 %s101, %s102
      %p104 = scmp.eq.s32.totalorder %s103, 0
      %s106 = sadd.s32 %s105, 1
      %s107 = scalar_select %p104, %s105, %s106
      %p110 = pneg %p104
      %p111 = scmp.eq.s32.totalorder %s18, 1
      %p112 = por %p110, %p111
      %p113 = scmp.ne.s32.totalorder %s105, %s108
      %p114 = scmp.eq.s32.totalorder %s18, 0
      %p115 = por %p113, %p114
      %p116 = scmp.ne.s32.totalorder %s105, %s108
      %p117 = scmp.eq.s32.totalorder %s23, 1
      %p118 = por %p116, %p117
      %p119 = scmp.ne.s32.totalorder %s108, %s109
      %p120 = scmp.eq.s32.totalorder %s23, 0
      %p121 = por %p119, %p120
      %p122 = scmp.ne.s32.totalorder %s108, %s109
      %p123 = scmp.eq.s32.totalorder %s24, 1
      %p124 = por %p122, %p123
      %p126 = scmp.ne.s32.totalorder %s109, %s125
      %p127 = scmp.eq.s32.totalorder %s24, 0
      %p128 = por %p126, %p127
      %s129 = ssub.s32 %s25, %s44
      %s130 = ssub.s32 %s26, %s40
      %s131 = sor.u32 %s129, %s130
      %p132 = scmp.eq.s32.totalorder %s131, 0
      %s134 = sadd.s32 %s133, 1
      %s135 = scalar_select %p132, %s133, %s134
      %p138 = pneg %p132
      %p139 = scmp.eq.s32.totalorder %s18, 1
      %p140 = por %p138, %p139
      %p141 = scmp.ne.s32.totalorder %s133, %s136
      %p142 = scmp.eq.s32.totalorder %s18, 0
      %p143 = por %p141, %p142
      %p144 = scmp.ne.s32.totalorder %s133, %s136
      %p145 = scmp.eq.s32.totalorder %s23, 1
      %p146 = por %p144, %p145
      %p147 = scmp.ne.s32.totalorder %s136, %s137
      %p148 = scmp.eq.s32.totalorder %s23, 0
      %p149 = por %p147, %p148
      %p150 = scmp.ne.s32.totalorder %s136, %s137
      %p151 = scmp.eq.s32.totalorder %s24, 1
      %p152 = por %p150, %p151
      %p154 = scmp.ne.s32.totalorder %s137, %s153
      %p155 = scmp.eq.s32.totalorder %s24, 0
      %p156 = por %p154, %p155
      %p157 = scmp.le.s32.totalorder 1, %s18
      %p158 = scmp.lt.s32.totalorder %s18, 3
      %p159 = pnand %p157, %p158
      %p160 = pneg %p159
      // Predicated region
      $region9: #{tpu_custom_call.1} parent=5 // pred_check
        _
      $region10: #{tpu_custom_call.1} parent=5 // pred_check_branch
        %162 = sbr.rel (%p159) target = $region12
      $region11: #{tpu_custom_call.1} parent=5 // pred_region
        %s163 = ssub.s32 %s18, 1
      $region12: #{tpu_custom_call.1} parent=5 // pred_fallthru
        _
      %p164 = scmp.lt.s32.totalorder %s18, 2
      // Predicated region
      $region13: #{tpu_custom_call.1} parent=5 // pred_check
        %p165 = pneg %p164
      $region14: #{tpu_custom_call.1} parent=5 // pred_check_branch
        %167 = sbr.rel (%p165) target = $region16
      $region15: #{tpu_custom_call.1} parent=5 // pred_region
        // Predicated region
        $region17: #{tpu_custom_call.1} parent=15 // pred_check
          %p168 = pneg %p59
        $region18: #{tpu_custom_call.1} parent=15 // pred_check_branch
          %170 = sbr.rel (%p168) target = $region20
        $region19: #{tpu_custom_call.1} parent=15 // pred_region
          %s171 = sand.u32 %s49, 1
          %s172 = scalar_lea.sflag [#allocation6], %s171
          %s173 = sand.u32 %s49, 1
          %s174 = smul.addr %s173, 8
          %s175 = scalar_lea.vmem [#allocation5], %s174
          %s177 = ssub.s32 128, 128
          %178 = vsyncadd %s172, %s177
          %s179 = sadd.s32 %s26, %s25
          %s180 = smul.addr %s179, 128
          %s181 = scalar_lea.hbm %s0, %s180
          %s183 = sshll.u32 %s175, 4
          %s184 = int_to_ptr.vmem [resolvable:$true] %s183
          %186 = dma.hbm_to_vmem [thread:$0]  %s181, 128, %s184, %s172
        $region20: #{tpu_custom_call.1} parent=15 // pred_fallthru
          _
        // Predicated region
        $region21: #{tpu_custom_call.1} parent=15 // pred_check
          %p187 = pneg %p87
        $region22: #{tpu_custom_call.1} parent=15 // pred_check_branch
          %189 = sbr.rel (%p187) target = $region24
        $region23: #{tpu_custom_call.1} parent=15 // pred_region
          %s190 = sand.u32 %s18, 1
          %s191 = scalar_lea.sflag [#allocation9], %s190
          %s192 = sand.u32 %s77, 1
          %s193 = smul.addr %s192, 8
          %s194 = scalar_lea.vmem [#allocation8], %s193
          %s196 = ssub.s32 128, 128
          %197 = vsyncadd %s191, %s196
          %s198 = sadd.s32 %s27, %s25
          %s199 = smul.addr %s198, 128
          %s200 = scalar_lea.hbm %s1, %s199
          %s202 = sshll.u32 %s194, 4
          %s203 = int_to_ptr.vmem [resolvable:$true] %s202
          %205 = dma.hbm_to_vmem [thread:$0]  %s200, 128, %s203, %s191
        $region24: #{tpu_custom_call.1} parent=15 // pred_fallthru
          _
        // Predicated region
        $region25: #{tpu_custom_call.1} parent=15 // pred_check
          %p206 = pneg %p115
        $region26: #{tpu_custom_call.1} parent=15 // pred_check_branch
          %208 = sbr.rel (%p206) target = $region28
        $region27: #{tpu_custom_call.1} parent=15 // pred_region
          %s209 = sand.u32 %s18, 1
          %s210 = scalar_lea.sflag [#allocation9], %s209
          %s211 = sand.u32 %s105, 1
          %s212 = smul.addr %s211, 8
          %s213 = scalar_lea.vmem [#allocation10], %s212
          %s215 = ssub.s32 128, 128
          %216 = vsyncadd %s210, %s215
          %s217 = sadd.s32 %s27, %s25
          %s218 = smul.addr %s217, 128
          %s219 = scalar_lea.hbm %s2, %s218
          %s221 = sshll.u32 %s213, 4
          %s222 = int_to_ptr.vmem [resolvable:$true] %s221
          %224 = dma.hbm_to_vmem [thread:$0]  %s219, 128, %s222, %s210
        $region28: #{tpu_custom_call.1} parent=15 // pred_fallthru
          _
      $region16: #{tpu_custom_call.1} parent=5 // pred_fallthru
        _
      %p225 = scmp.le.s32.totalorder 1, %s18
      %p226 = scmp.lt.s32.totalorder %s18, 3
      %p227 = pnand %p225, %p226
      %p228 = pneg %p227
      // Predicated region
      $region29: #{tpu_custom_call.1} parent=5 // pred_check
        _
      $region30: #{tpu_custom_call.1} parent=5 // pred_check_branch
        %230 = sbr.rel (%p227) target = $region32
      $region31: #{tpu_custom_call.1} parent=5 // pred_region
        %s231 = ssub.s32 %s18, 1
        %s232 = sand.u32 %s52, 1
        %s233 = scalar_lea.sflag [#allocation6], %s232
        %s234 = sand.u32 %s52, 1
        %s235 = smul.addr %s234, 8
        %s236 = scalar_lea.vmem [#allocation5], %s235
        // Predicated region
        $region33: #{tpu_custom_call.1} parent=31 // pred_check
          %p237 = pneg %p65
        $region34: #{tpu_custom_call.1} parent=31 // pred_check_branch
          %239 = sbr.rel (%p237) target = $region36
        $region35: #{tpu_custom_call.1} parent=31 // pred_region
          %240 = dma.done %s233, 128
        $region36: #{tpu_custom_call.1} parent=31 // pred_fallthru
          _
        %s241 = sand.u32 %s23, 1
        %s242 = scalar_lea.sflag [#allocation9], %s241
        %s243 = sand.u32 %s80, 1
        %s244 = smul.addr %s243, 8
        %s245 = scalar_lea.vmem [#allocation8], %s244
        // Predicated region
        $region37: #{tpu_custom_call.1} parent=31 // pred_check
          %p246 = pneg %p93
        $region38: #{tpu_custom_call.1} parent=31 // pred_check_branch
          %248 = sbr.rel (%p246) target = $region40
        $region39: #{tpu_custom_call.1} parent=31 // pred_region
          %249 = dma.done %s242, 128
        $region40: #{tpu_custom_call.1} parent=31 // pred_fallthru
          _
        %s250 = sand.u32 %s23, 1
        %s251 = scalar_lea.sflag [#allocation9], %s250
        %s252 = sand.u32 %s108, 1
        %s253 = smul.addr %s252, 8
        %s254 = scalar_lea.vmem [#allocation10], %s253
        // Predicated region
        $region41: #{tpu_custom_call.1} parent=31 // pred_check
          %p255 = pneg %p121
        $region42: #{tpu_custom_call.1} parent=31 // pred_check_branch
          %257 = sbr.rel (%p255) target = $region44
        $region43: #{tpu_custom_call.1} parent=31 // pred_region
          %258 = dma.done %s251, 128
        $region44: #{tpu_custom_call.1} parent=31 // pred_fallthru
          _
        %s259 = sand.u32 %s52, 1
        %s260 = scalar_lea.sflag [#allocation6], %s259
        %s261 = sand.u32 %s52, 1
        %s262 = smul.addr %s261, 8
        %s263 = scalar_lea.vmem [#allocation5], %s262
        %p264 = pneg %p65
        %p265 = pneg %p62
        %s266 = sand.u32 %s23, 1
        %s267 = scalar_lea.sflag [#allocation9], %s266
        %s268 = sand.u32 %s80, 1
        %s269 = smul.addr %s268, 8
        %s270 = scalar_lea.vmem [#allocation8], %s269
        %p271 = pneg %p93
        %p272 = pneg %p90
        %s273 = sand.u32 %s23, 1
        %s274 = scalar_lea.sflag [#allocation9], %s273
        %s275 = sand.u32 %s108, 1
        %s276 = smul.addr %s275, 8
        %s277 = scalar_lea.vmem [#allocation10], %s276
        %p278 = pneg %p121
        %p279 = pneg %p118
        %p280 = pneg %p149
        %p281 = pneg %p146
        %s282 = sand.u32 %s136, 1
        %s283 = scalar_lea.sflag [#allocation7], %s282
        %s284 = sand.u32 %s136, 1
        %s285 = smul.addr %s284, 8
        %s286 = scalar_lea.vmem [#allocation11], %s285
        %p287 = scmp.eq.s32.totalorder %s30, 0
        // Predicated region
        $region45: #{tpu_custom_call.1} parent=31 // pred_check
          %p288 = pneg %p287
        $region46: #{tpu_custom_call.1} parent=31 // pred_check_branch
          %290 = sbr.rel (%p288) target = $region48
        $region47: #{tpu_custom_call.1} parent=31 // pred_region
          %vm291 = vcmask 7168
          %292 = vst.msk [vmem:[#allocation2] sm:$0xff] %vm291, -1e+30
          %293 = vst.msk [vmem:[#allocation2 + $0x8] sm:$0xff] %vm291, -1e+30
          %294 = vst.msk [vmem:[#allocation2 + $0x10] sm:$0xff] %vm291, -1e+30
          %295 = vst.msk [vmem:[#allocation2 + $0x18] sm:$0xff] %vm291, -1e+30
          %296 = vst.msk [vmem:[#allocation3] sm:$0xff] %vm291, 0.0
          %297 = vst.msk [vmem:[#allocation3 + $0x8] sm:$0xff] %vm291, 0.0
          %298 = vst.msk [vmem:[#allocation3 + $0x10] sm:$0xff] %vm291, 0.0
          %299 = vst.msk [vmem:[#allocation3 + $0x18] sm:$0xff] %vm291, 0.0
          %vm300 = vcmask 261120
          %301 = vst.msk [vmem:[#allocation4] sm:$0xff] %vm300, 0.0
          %302 = vst.msk [vmem:[#allocation4 + $0x8] sm:$0xff] %vm300, 0.0
          %303 = vst.msk [vmem:[#allocation4 + $0x10] sm:$0xff] %vm300, 0.0
          %304 = vst.msk [vmem:[#allocation4 + $0x18] sm:$0xff] %vm300, 0.0
        $region48: #{tpu_custom_call.1} parent=31 // pred_fallthru
          _
        %v305 = vld [vmem:[%s236] sm:$0xff]
        %v306 = vmul.f32 %v305, 0.17677669
        %v307 = vld [vmem:[%s245] sm:$0xff]
        %v308 = vld [vmem:[%s254] sm:$0xff]
        %vm309 = vcmask 261120
        %v311 = vsel %vm309, %v306, 0
        %v314 = vsel %vm309, %v307, 0
        %316 = vmatprep.subr.mxu0 0.0
        %317 = vmatpush1.xpose.msra.mxu0 %v314
        %318 = vmatprep.subr.mxu0 0.0
        %319 = vmatpush1.xpose.msra.mxu0 0.0
        %320 = vmatprep.subr.mxu0 0.0
        %321 = vmatpush1.xpose.msra.mxu0 0.0
        %322 = vmatprep.subr.mxu0 0.0
        %323 = vmatpush1.xpose.msra.mxu0 0.0
        %324 = vmatprep.subr.mxu0 0.0
        %325 = vmatpush1.xpose.msra.mxu0 0.0
        %326 = vmatprep.subr.mxu0 0.0
        %327 = vmatpush1.xpose.msra.mxu0 0.0
        %328 = vmatprep.subr.mxu0 0.0
        %329 = vmatpush1.xpose.msra.mxu0 0.0
        %330 = vmatprep.subr.mxu0 0.0
        %331 = vmatpush1.xpose.msra.mxu0 0.0
        %332 = vmatprep.subr.mxu0 0.0
        %333 = vmatpush1.xpose.msra.mxu0 0.0
        %334 = vmatprep.subr.mxu0 0.0
        %335 = vmatpush1.xpose.msra.mxu0 0.0
        %336 = vmatprep.subr.mxu0 0.0
        %337 = vmatpush1.xpose.msra.mxu0 0.0
        %338 = vmatprep.subr.mxu0 0.0
        %339 = vmatpush1.xpose.msra.mxu0 0.0
        %340 = vmatprep.subr.mxu0 0.0
        %341 = vmatpush1.xpose.msra.mxu0 0.0
        %342 = vmatprep.subr.mxu0 0.0
        %343 = vmatpush1.xpose.msra.mxu0 0.0
        %344 = vmatprep.subr.mxu0 0.0
        %345 = vmatpush1.xpose.msra.mxu0 0.0
        %346 = vmatprep.subr.mxu0 0.0
        %347 = vmatpush1.xpose.msra.mxu0 0.0
        %348 = vmatprep.subr.mxu0 0.0
        %349 = vmatpush1.xpose.msra.mxu0 0.0
        %350 = vmatprep.subr.mxu0 0.0
        %351 = vmatpush1.xpose.msra.mxu0 0.0
        %352 = vmatprep.subr.mxu0 0.0
        %353 = vmatpush1.xpose.msra.mxu0 0.0
        %354 = vmatprep.subr.mxu0 0.0
        %355 = vmatpush1.xpose.msra.mxu0 0.0
        %356 = vmatprep.subr.mxu0 0.0
        %357 = vmatpush1.xpose.msra.mxu0 0.0
        %358 = vmatprep.subr.mxu0 0.0
        %359 = vmatpush1.xpose.msra.mxu0 0.0
        %360 = vmatprep.subr.mxu0 0.0
        %361 = vmatpush1.xpose.msra.mxu0 0.0
        %362 = vmatprep.subr.mxu0 0.0
        %363 = vmatpush1.xpose.msra.mxu0 0.0
        %364 = vmatprep.subr.mxu0 0.0
        %365 = vmatpush1.xpose.msra.mxu0 0.0
        %366 = vmatprep.subr.mxu0 0.0
        %367 = vmatpush1.xpose.msra.mxu0 0.0
        %368 = vmatprep.subr.mxu0 0.0
        %369 = vmatpush1.xpose.msra.mxu0 0.0
        %370 = vmatprep.subr.mxu0 0.0
        %371 = vmatpush1.xpose.msra.mxu0 0.0
        %372 = vmatprep.subr.mxu0 0.0
        %373 = vmatpush1.xpose.msra.mxu0 0.0
        %374 = vmatprep.subr.mxu0 0.0
        %375 = vmatpush1.xpose.msra.mxu0 0.0
        %376 = vmatprep.subr.mxu0 0.0
        %377 = vmatpush1.xpose.msra.mxu0 0.0
        %378 = vmatprep.subr.mxu0 0.0
        %379 = vmatpush1.xpose.msra.mxu0 0.0
        %380 = vmatprep.mubr.f32.mxu0 0.0
        %381 = vmatmul.mubr.f32.gmra.mrb[0].mxu0 %v311
        %v382 = vpop.f32.mrb[0].mxu0
        %v383 = vadd.f32 0.0, %v382
        %v384 = vpop.f32.mrb[0].mxu0
        %385 = vdwg.mxu0
        %v386 = vld [vmem:[#allocation2] sm:$0xff]
        %v387 = vld [vmem:[#allocation3] sm:$0xff]
        %vm388 = vcmask 64512
        %v389 = vsel %vm388, %v383, -inf
        %390 = vmax.xlane.f32.xlu0 %v389
        %v391 = vpop.xlane.xlu0 %390
        %v392 = vmax.f32 %v386, %v391
        %v393 = vsub.f32 %v386, %v392
        %v394 = vmul.f32 %v393, 1.442695
        %v395 = vpow.pop %v394
        %397 = vset.pattern.permute.xlu0 0
        %398 = vperm.xlu0 %397, %v392
        %v399 = vpop.permute.xlu0 %398
        %v401 = vsub.f32 %v383, %v399
        %v402 = vmul.f32 %v401, 1.442695
        %v403 = vpow.pop %v402
        %v404 = vmul.f32 %v395, %v387
        %v405 = vsel %vm388, %v403, 0.0
        %406 = vadd.xlane.f32.xlu0 %v405
        %v407 = vpop.xlane.xlu0 %406
        %v408 = vadd.f32 %v404, %v407
        %vm409 = vcmask 7168
        %410 = vst.msk [vmem:[#allocation3] sm:$0xff] %vm409, %v408
        %v411 = vld [vmem:[#allocation4] sm:$0xff]
        %413 = vset.pattern.permute.xlu0 0
        %414 = vperm.xlu0 %413, %v395
        %v415 = vpop.permute.xlu0 %414
        %v417 = vmul.f32 %v415, %v411
        %v419 = vsel %vm388, %v403, 0
        %421 = vmatprep.subr.mxu0 0.0
        %422 = vmatpush1.msra.mxu0 %v308
        %423 = vmatprep.subr.mxu0 0.0
        %424 = vmatpush1.msra.mxu0 0.0
        %425 = vmatprep.subr.mxu0 0.0
        %426 = vmatpush1.msra.mxu0 0.0
        %427 = vmatprep.subr.mxu0 0.0
        %428 = vmatpush1.msra.mxu0 0.0
        %429 = vmatprep.subr.mxu0 0.0
        %430 = vmatpush1.msra.mxu0 0.0
        %431 = vmatprep.subr.mxu0 0.0
        %432 = vmatpush1.msra.mxu0 0.0
        %433 = vmatprep.subr.mxu0 0.0
        %434 = vmatpush1.msra.mxu0 0.0
        %435 = vmatprep.subr.mxu0 0.0
        %436 = vmatpush1.msra.mxu0 0.0
        %437 = vmatprep.subr.mxu0 0.0
        %438 = vmatpush1.msra.mxu0 0.0
        %439 = vmatprep.subr.mxu0 0.0
        %440 = vmatpush1.msra.mxu0 0.0
        %441 = vmatprep.subr.mxu0 0.0
        %442 = vmatpush1.msra.mxu0 0.0
        %443 = vmatprep.subr.mxu0 0.0
        %444 = vmatpush1.msra.mxu0 0.0
        %445 = vmatprep.subr.mxu0 0.0
        %446 = vmatpush1.msra.mxu0 0.0
        %447 = vmatprep.subr.mxu0 0.0
        %448 = vmatpush1.msra.mxu0 0.0
        %449 = vmatprep.subr.mxu0 0.0
        %450 = vmatpush1.msra.mxu0 0.0
        %451 = vmatprep.subr.mxu0 0.0
        %452 = vmatpush1.msra.mxu0 0.0
        %453 = vmatprep.subr.mxu0 0.0
        %454 = vmatpush1.msra.mxu0 0.0
        %455 = vmatprep.subr.mxu0 0.0
        %456 = vmatpush1.msra.mxu0 0.0
        %457 = vmatprep.subr.mxu0 0.0
        %458 = vmatpush1.msra.mxu0 0.0
        %459 = vmatprep.subr.mxu0 0.0
        %460 = vmatpush1.msra.mxu0 0.0
        %461 = vmatprep.subr.mxu0 0.0
        %462 = vmatpush1.msra.mxu0 0.0
        %463 = vmatprep.subr.mxu0 0.0
        %464 = vmatpush1.msra.mxu0 0.0
        %465 = vmatprep.subr.mxu0 0.0
        %466 = vmatpush1.msra.mxu0 0.0
        %467 = vmatprep.subr.mxu0 0.0
        %468 = vmatpush1.msra.mxu0 0.0
        %469 = vmatprep.subr.mxu0 0.0
        %470 = vmatpush1.msra.mxu0 0.0
        %471 = vmatprep.subr.mxu0 0.0
        %472 = vmatpush1.msra.mxu0 0.0
        %473 = vmatprep.subr.mxu0 0.0
        %474 = vmatpush1.msra.mxu0 0.0
        %475 = vmatprep.subr.mxu0 0.0
        %476 = vmatpush1.msra.mxu0 0.0
        %477 = vmatprep.subr.mxu0 0.0
        %478 = vmatpush1.msra.mxu0 0.0
        %479 = vmatprep.subr.mxu0 0.0
        %480 = vmatpush1.msra.mxu0 0.0
        %481 = vmatprep.subr.mxu0 0.0
        %482 = vmatpush1.msra.mxu0 0.0
        %483 = vmatprep.subr.mxu0 0.0
        %484 = vmatpush1.msra.mxu0 0.0
        %485 = vmatprep.mubr.f32.mxu0 0.0
        %486 = vmatmul.mubr.f32.gmra.mrb[0].mxu0 %v419
        %v487 = vpop.f32.mrb[0].mxu0
        %v488 = vadd.f32 0.0, %v487
        %v489 = vpop.f32.mrb[0].mxu0
        %490 = vdwg.mxu0
        %v491 = vadd.f32 %v417, %v488
        %492 = vst.msk [vmem:[#allocation4] sm:$0xff] %vm309, %v491
        %493 = vst.msk [vmem:[#allocation2] sm:$0xff] %vm409, %v392
        %v494 = vld [vmem:[%s236] sm:$0xff]
        %v495 = vmul.f32 %v494, 0.17677669
        %v496 = vld [vmem:[%s245] sm:$0xff]
        %v497 = vld [vmem:[%s254] sm:$0xff]
        %499 = vrot.lane.b32.xlu0 %v495, 96
        %v500 = vpop.permute.xlu0 %499
        %502 = vrot.lane.b32.xlu0 %v496, 96
        %v503 = vpop.permute.xlu0 %502
        %v504 = vsel %vm309, %v500, 0
        %v506 = vsel %vm309, %v503, 0
        %508 = vmatprep.subr.mxu0 0.0
        %509 = vmatpush1.xpose.msra.mxu0 %v506
        %510 = vmatprep.subr.mxu0 0.0
        %511 = vmatpush1.xpose.msra.mxu0 0.0
        %512 = vmatprep.subr.mxu0 0.0
        %513 = vmatpush1.xpose.msra.mxu0 0.0
        %514 = vmatprep.subr.mxu0 0.0
        %515 = vmatpush1.xpose.msra.mxu0 0.0
        %516 = vmatprep.subr.mxu0 0.0
        %517 = vmatpush1.xpose.msra.mxu0 0.0
        %518 = vmatprep.subr.mxu0 0.0
        %519 = vmatpush1.xpose.msra.mxu0 0.0
        %520 = vmatprep.subr.mxu0 0.0
        %521 = vmatpush1.xpose.msra.mxu0 0.0
        %522 = vmatprep.subr.mxu0 0.0
        %523 = vmatpush1.xpose.msra.mxu0 0.0
        %524 = vmatprep.subr.mxu0 0.0
        %525 = vmatpush1.xpose.msra.mxu0 0.0
        %526 = vmatprep.subr.mxu0 0.0
        %527 = vmatpush1.xpose.msra.mxu0 0.0
        %528 = vmatprep.subr.mxu0 0.0
        %529 = vmatpush1.xpose.msra.mxu0 0.0
        %530 = vmatprep.subr.mxu0 0.0
        %531 = vmatpush1.xpose.msra.mxu0 0.0
        %532 = vmatprep.subr.mxu0 0.0
        %533 = vmatpush1.xpose.msra.mxu0 0.0
        %534 = vmatprep.subr.mxu0 0.0
        %535 = vmatpush1.xpose.msra.mxu0 0.0
        %536 = vmatprep.subr.mxu0 0.0
        %537 = vmatpush1.xpose.msra.mxu0 0.0
        %538 = vmatprep.subr.mxu0 0.0
        %539 = vmatpush1.xpose.msra.mxu0 0.0
        %540 = vmatprep.subr.mxu0 0.0
        %541 = vmatpush1.xpose.msra.mxu0 0.0
        %542 = vmatprep.subr.mxu0 0.0
        %543 = vmatpush1.xpose.msra.mxu0 0.0
        %544 = vmatprep.subr.mxu0 0.0
        %545 = vmatpush1.xpose.msra.mxu0 0.0
        %546 = vmatprep.subr.mxu0 0.0
        %547 = vmatpush1.xpose.msra.mxu0 0.0
        %548 = vmatprep.subr.mxu0 0.0
        %549 = vmatpush1.xpose.msra.mxu0 0.0
        %550 = vmatprep.subr.mxu0 0.0
        %551 = vmatpush1.xpose.msra.mxu0 0.0
        %552 = vmatprep.subr.mxu0 0.0
        %553 = vmatpush1.xpose.msra.mxu0 0.0
        %554 = vmatprep.subr.mxu0 0.0
        %555 = vmatpush1.xpose.msra.mxu0 0.0
        %556 = vmatprep.subr.mxu0 0.0
        %557 = vmatpush1.xpose.msra.mxu0 0.0
        %558 = vmatprep.subr.mxu0 0.0
        %559 = vmatpush1.xpose.msra.mxu0 0.0
        %560 = vmatprep.subr.mxu0 0.0
        %561 = vmatpush1.xpose.msra.mxu0 0.0
        %562 = vmatprep.subr.mxu0 0.0
        %563 = vmatpush1.xpose.msra.mxu0 0.0
        %564 = vmatprep.subr.mxu0 0.0
        %565 = vmatpush1.xpose.msra.mxu0 0.0
        %566 = vmatprep.subr.mxu0 0.0
        %567 = vmatpush1.xpose.msra.mxu0 0.0
        %568 = vmatprep.subr.mxu0 0.0
        %569 = vmatpush1.xpose.msra.mxu0 0.0
        %570 = vmatprep.subr.mxu0 0.0
        %571 = vmatpush1.xpose.msra.mxu0 0.0
        %572 = vmatprep.mubr.f32.mxu0 0.0
        %573 = vmatmul.mubr.f32.gmra.mrb[0].mxu0 %v504
        %v574 = vpop.f32.mrb[0].mxu0
        %v575 = vadd.f32 0.0, %v574
        %v576 = vpop.f32.mrb[0].mxu0
        %577 = vdwg.mxu0
        %s578 = scalar_lea.vmem [#allocation2], 8
        %v579 = vld [vmem:[%s578] sm:$0xff]
        %s580 = scalar_lea.vmem [#allocation3], 8
        %v581 = vld [vmem:[%s580] sm:$0xff]
        %v582 = vsel %vm388, %v575, -inf
        %583 = vmax.xlane.f32.xlu0 %v582
        %v584 = vpop.xlane.xlu0 %583
        %v585 = vmax.f32 %v579, %v584
        %v586 = vsub.f32 %v579, %v585
        %v587 = vmul.f32 %v586, 1.442695
        %v588 = vpow.pop %v587
        %590 = vset.pattern.permute.xlu0 0
        %591 = vperm.xlu0 %590, %v585
        %v592 = vpop.permute.xlu0 %591
        %v594 = vsub.f32 %v575, %v592
        %v595 = vmul.f32 %v594, 1.442695
        %v596 = vpow.pop %v595
        %v597 = vmul.f32 %v588, %v581
        %v598 = vsel %vm388, %v596, 0.0
        %599 = vadd.xlane.f32.xlu0 %v598
        %v600 = vpop.xlane.xlu0 %599
        %v601 = vadd.f32 %v597, %v600
        %602 = vst.msk [vmem:[%s580] sm:$0xff] %vm409, %v601
        %s603 = scalar_lea.vmem [#allocation4], 8
        %v604 = vld [vmem:[%s603] sm:$0xff]
        %606 = vset.pattern.permute.xlu0 0
        %607 = vperm.xlu0 %606, %v588
        %v608 = vpop.permute.xlu0 %607
        %v610 = vmul.f32 %v608, %v604
        %612 = vrot.lane.b32.xlu0 %v497, 96
        %v613 = vpop.permute.xlu0 %612
        %v616 = vsel %vm388, %v596, 0
        %618 = vmatprep.subr.mxu0 0.0
        %619 = vmatpush1.msra.mxu0 %v613
        %620 = vmatprep.subr.mxu0 0.0
        %621 = vmatpush1.msra.mxu0 0.0
        %622 = vmatprep.subr.mxu0 0.0
        %623 = vmatpush1.msra.mxu0 0.0
        %624 = vmatprep.subr.mxu0 0.0
        %625 = vmatpush1.msra.mxu0 0.0
        %626 = vmatprep.subr.mxu0 0.0
        %627 = vmatpush1.msra.mxu0 0.0
        %628 = vmatprep.subr.mxu0 0.0
        %629 = vmatpush1.msra.mxu0 0.0
        %630 = vmatprep.subr.mxu0 0.0
        %631 = vmatpush1.msra.mxu0 0.0
        %632 = vmatprep.subr.mxu0 0.0
        %633 = vmatpush1.msra.mxu0 0.0
        %634 = vmatprep.subr.mxu0 0.0
        %635 = vmatpush1.msra.mxu0 0.0
        %636 = vmatprep.subr.mxu0 0.0
        %637 = vmatpush1.msra.mxu0 0.0
        %638 = vmatprep.subr.mxu0 0.0
        %639 = vmatpush1.msra.mxu0 0.0
        %640 = vmatprep.subr.mxu0 0.0
        %641 = vmatpush1.msra.mxu0 0.0
        %642 = vmatprep.subr.mxu0 0.0
        %643 = vmatpush1.msra.mxu0 0.0
        %644 = vmatprep.subr.mxu0 0.0
        %645 = vmatpush1.msra.mxu0 0.0
        %646 = vmatprep.subr.mxu0 0.0
        %647 = vmatpush1.msra.mxu0 0.0
        %648 = vmatprep.subr.mxu0 0.0
        %649 = vmatpush1.msra.mxu0 0.0
        %650 = vmatprep.subr.mxu0 0.0
        %651 = vmatpush1.msra.mxu0 0.0
        %652 = vmatprep.subr.mxu0 0.0
        %653 = vmatpush1.msra.mxu0 0.0
        %654 = vmatprep.subr.mxu0 0.0
        %655 = vmatpush1.msra.mxu0 0.0
        %656 = vmatprep.subr.mxu0 0.0
        %657 = vmatpush1.msra.mxu0 0.0
        %658 = vmatprep.subr.mxu0 0.0
        %659 = vmatpush1.msra.mxu0 0.0
        %660 = vmatprep.subr.mxu0 0.0
        %661 = vmatpush1.msra.mxu0 0.0
        %662 = vmatprep.subr.mxu0 0.0
        %663 = vmatpush1.msra.mxu0 0.0
        %664 = vmatprep.subr.mxu0 0.0
        %665 = vmatpush1.msra.mxu0 0.0
        %666 = vmatprep.subr.mxu0 0.0
        %667 = vmatpush1.msra.mxu0 0.0
        %668 = vmatprep.subr.mxu0 0.0
        %669 = vmatpush1.msra.mxu0 0.0
        %670 = vmatprep.subr.mxu0 0.0
        %671 = vmatpush1.msra.mxu0 0.0
        %672 = vmatprep.subr.mxu0 0.0
        %673 = vmatpush1.msra.mxu0 0.0
        %674 = vmatprep.subr.mxu0 0.0
        %675 = vmatpush1.msra.mxu0 0.0
        %676 = vmatprep.subr.mxu0 0.0
        %677 = vmatpush1.msra.mxu0 0.0
        %678 = vmatprep.subr.mxu0 0.0
        %679 = vmatpush1.msra.mxu0 0.0
        %680 = vmatprep.subr.mxu0 0.0
        %681 = vmatpush1.msra.mxu0 0.0
        %682 = vmatprep.mubr.f32.mxu0 0.0
        %683 = vmatmul.mubr.f32.gmra.mrb[0].mxu0 %v616
        %v684 = vpop.f32.mrb[0].mxu0
        %v685 = vadd.f32 0.0, %v684
        %v686 = vpop.f32.mrb[0].mxu0
        %687 = vdwg.mxu0
        %v688 = vadd.f32 %v610, %v685
        %689 = vst.msk [vmem:[%s603] sm:$0xff] %vm309, %v688
        %690 = vst.msk [vmem:[%s578] sm:$0xff] %vm409, %v585
        %v691 = vld [vmem:[%s236] sm:$0xff]
        %v692 = vmul.f32 %v691, 0.17677669
        %v693 = vld [vmem:[%s245] sm:$0xff]
        %v694 = vld [vmem:[%s254] sm:$0xff]
        %696 = vrot.lane.b32.xlu0 %v692, 64
        %v697 = vpop.permute.xlu0 %696
        %699 = vrot.lane.b32.xlu0 %v693, 64
        %v700 = vpop.permute.xlu0 %699
        %v701 = vsel %vm309, %v697, 0
        %v703 = vsel %vm309, %v700, 0
        %705 = vmatprep.subr.mxu0 0.0
        %706 = vmatpush1.xpose.msra.mxu0 %v703
        %707 = vmatprep.subr.mxu0 0.0
        %708 = vmatpush1.xpose.msra.mxu0 0.0
        %709 = vmatprep.subr.mxu0 0.0
        %710 = vmatpush1.xpose.msra.mxu0 0.0
        %711 = vmatprep.subr.mxu0 0.0
        %712 = vmatpush1.xpose.msra.mxu0 0.0
        %713 = vmatprep.subr.mxu0 0.0
        %714 = vmatpush1.xpose.msra.mxu0 0.0
        %715 = vmatprep.subr.mxu0 0.0
        %716 = vmatpush1.xpose.msra.mxu0 0.0
        %717 = vmatprep.subr.mxu0 0.0
        %718 = vmatpush1.xpose.msra.mxu0 0.0
        %719 = vmatprep.subr.mxu0 0.0
        %720 = vmatpush1.xpose.msra.mxu0 0.0
        %721 = vmatprep.subr.mxu0 0.0
        %722 = vmatpush1.xpose.msra.mxu0 0.0
        %723 = vmatprep.subr.mxu0 0.0
        %724 = vmatpush1.xpose.msra.mxu0 0.0
        %725 = vmatprep.subr.mxu0 0.0
        %726 = vmatpush1.xpose.msra.mxu0 0.0
        %727 = vmatprep.subr.mxu0 0.0
        %728 = vmatpush1.xpose.msra.mxu0 0.0
        %729 = vmatprep.subr.mxu0 0.0
        %730 = vmatpush1.xpose.msra.mxu0 0.0
        %731 = vmatprep.subr.mxu0 0.0
        %732 = vmatpush1.xpose.msra.mxu0 0.0
        %733 = vmatprep.subr.mxu0 0.0
        %734 = vmatpush1.xpose.msra.mxu0 0.0
        %735 = vmatprep.subr.mxu0 0.0
        %736 = vmatpush1.xpose.msra.mxu0 0.0
        %737 = vmatprep.subr.mxu0 0.0
        %738 = vmatpush1.xpose.msra.mxu0 0.0
        %739 = vmatprep.subr.mxu0 0.0
        %740 = vmatpush1.xpose.msra.mxu0 0.0
        %741 = vmatprep.subr.mxu0 0.0
        %742 = vmatpush1.xpose.msra.mxu0 0.0
        %743 = vmatprep.subr.mxu0 0.0
        %744 = vmatpush1.xpose.msra.mxu0 0.0
        %745 = vmatprep.subr.mxu0 0.0
        %746 = vmatpush1.xpose.msra.mxu0 0.0
        %747 = vmatprep.subr.mxu0 0.0
        %748 = vmatpush1.xpose.msra.mxu0 0.0
        %749 = vmatprep.subr.mxu0 0.0
        %750 = vmatpush1.xpose.msra.mxu0 0.0
        %751 = vmatprep.subr.mxu0 0.0
        %752 = vmatpush1.xpose.msra.mxu0 0.0
        %753 = vmatprep.subr.mxu0 0.0
        %754 = vmatpush1.xpose.msra.mxu0 0.0
        %755 = vmatprep.subr.mxu0 0.0
        %756 = vmatpush1.xpose.msra.mxu0 0.0
        %757 = vmatprep.subr.mxu0 0.0
        %758 = vmatpush1.xpose.msra.mxu0 0.0
        %759 = vmatprep.subr.mxu0 0.0
        %760 = vmatpush1.xpose.msra.mxu0 0.0
        %761 = vmatprep.subr.mxu0 0.0
        %762 = vmatpush1.xpose.msra.mxu0 0.0
        %763 = vmatprep.subr.mxu0 0.0
        %764 = vmatpush1.xpose.msra.mxu0 0.0
        %765 = vmatprep.subr.mxu0 0.0
        %766 = vmatpush1.xpose.msra.mxu0 0.0
        %767 = vmatprep.subr.mxu0 0.0
        %768 = vmatpush1.xpose.msra.mxu0 0.0
        %769 = vmatprep.mubr.f32.mxu0 0.0
        %770 = vmatmul.mubr.f32.gmra.mrb[0].mxu0 %v701
        %v771 = vpop.f32.mrb[0].mxu0
        %v772 = vadd.f32 0.0, %v771
        %v773 = vpop.f32.mrb[0].mxu0
        %774 = vdwg.mxu0
        %s775 = scalar_lea.vmem [#allocation2], 16
        %v776 = vld [vmem:[%s775] sm:$0xff]
        %s777 = scalar_lea.vmem [#allocation3], 16
        %v778 = vld [vmem:[%s777] sm:$0xff]
        %v779 = vsel %vm388, %v772, -inf
        %780 = vmax.xlane.f32.xlu0 %v779
        %v781 = vpop.xlane.xlu0 %780
        %v782 = vmax.f32 %v776, %v781
        %v783 = vsub.f32 %v776, %v782
        %v784 = vmul.f32 %v783, 1.442695
        %v785 = vpow.pop %v784
        %787 = vset.pattern.permute.xlu0 0
        %788 = vperm.xlu0 %787, %v782
        %v789 = vpop.permute.xlu0 %788
        %v791 = vsub.f32 %v772, %v789
        %v792 = vmul.f32 %v791, 1.442695
        %v793 = vpow.pop %v792
        %v794 = vmul.f32 %v785, %v778
        %v795 = vsel %vm388, %v793, 0.0
        %796 = vadd.xlane.f32.xlu0 %v795
        %v797 = vpop.xlane.xlu0 %796
        %v798 = vadd.f32 %v794, %v797
        %799 = vst.msk [vmem:[%s777] sm:$0xff] %vm409, %v798
        %s800 = scalar_lea.vmem [#allocation4], 16
        %v801 = vld [vmem:[%s800] sm:$0xff]
        %803 = vset.pattern.permute.xlu0 0
        %804 = vperm.xlu0 %803, %v785
        %v805 = vpop.permute.xlu0 %804
        %v807 = vmul.f32 %v805, %v801
        %809 = vrot.lane.b32.xlu0 %v694, 64
        %v810 = vpop.permute.xlu0 %809
        %v813 = vsel %vm388, %v793, 0
        %815 = vmatprep.subr.mxu0 0.0
        %816 = vmatpush1.msra.mxu0 %v810
        %817 = vmatprep.subr.mxu0 0.0
        %818 = vmatpush1.msra.mxu0 0.0
        %819 = vmatprep.subr.mxu0 0.0
        %820 = vmatpush1.msra.mxu0 0.0
        %821 = vmatprep.subr.mxu0 0.0
        %822 = vmatpush1.msra.mxu0 0.0
        %823 = vmatprep.subr.mxu0 0.0
        %824 = vmatpush1.msra.mxu0 0.0
        %825 = vmatprep.subr.mxu0 0.0
        %826 = vmatpush1.msra.mxu0 0.0
        %827 = vmatprep.subr.mxu0 0.0
        %828 = vmatpush1.msra.mxu0 0.0
        %829 = vmatprep.subr.mxu0 0.0
        %830 = vmatpush1.msra.mxu0 0.0
        %831 = vmatprep.subr.mxu0 0.0
        %832 = vmatpush1.msra.mxu0 0.0
        %833 = vmatprep.subr.mxu0 0.0
        %834 = vmatpush1.msra.mxu0 0.0
        %835 = vmatprep.subr.mxu0 0.0
        %836 = vmatpush1.msra.mxu0 0.0
        %837 = vmatprep.subr.mxu0 0.0
        %838 = vmatpush1.msra.mxu0 0.0
        %839 = vmatprep.subr.mxu0 0.0
        %840 = vmatpush1.msra.mxu0 0.0
        %841 = vmatprep.subr.mxu0 0.0
        %842 = vmatpush1.msra.mxu0 0.0
        %843 = vmatprep.subr.mxu0 0.0
        %844 = vmatpush1.msra.mxu0 0.0
        %845 = vmatprep.subr.mxu0 0.0
        %846 = vmatpush1.msra.mxu0 0.0
        %847 = vmatprep.subr.mxu0 0.0
        %848 = vmatpush1.msra.mxu0 0.0
        %849 = vmatprep.subr.mxu0 0.0
        %850 = vmatpush1.msra.mxu0 0.0
        %851 = vmatprep.subr.mxu0 0.0
        %852 = vmatpush1.msra.mxu0 0.0
        %853 = vmatprep.subr.mxu0 0.0
        %854 = vmatpush1.msra.mxu0 0.0
        %855 = vmatprep.subr.mxu0 0.0
        %856 = vmatpush1.msra.mxu0 0.0
        %857 = vmatprep.subr.mxu0 0.0
        %858 = vmatpush1.msra.mxu0 0.0
        %859 = vmatprep.subr.mxu0 0.0
        %860 = vmatpush1.msra.mxu0 0.0
        %861 = vmatprep.subr.mxu0 0.0
        %862 = vmatpush1.msra.mxu0 0.0
        %863 = vmatprep.subr.mxu0 0.0
        %864 = vmatpush1.msra.mxu0 0.0
        %865 = vmatprep.subr.mxu0 0.0
        %866 = vmatpush1.msra.mxu0 0.0
        %867 = vmatprep.subr.mxu0 0.0
        %868 = vmatpush1.msra.mxu0 0.0
        %869 = vmatprep.subr.mxu0 0.0
        %870 = vmatpush1.msra.mxu0 0.0
        %871 = vmatprep.subr.mxu0 0.0
        %872 = vmatpush1.msra.mxu0 0.0
        %873 = vmatprep.subr.mxu0 0.0
        %874 = vmatpush1.msra.mxu0 0.0
        %875 = vmatprep.subr.mxu0 0.0
        %876 = vmatpush1.msra.mxu0 0.0
        %877 = vmatprep.subr.mxu0 0.0
        %878 = vmatpush1.msra.mxu0 0.0
        %879 = vmatprep.mubr.f32.mxu0 0.0
        %880 = vmatmul.mubr.f32.gmra.mrb[0].mxu0 %v813
        %v881 = vpop.f32.mrb[0].mxu0
        %v882 = vadd.f32 0.0, %v881
        %v883 = vpop.f32.mrb[0].mxu0
        %884 = vdwg.mxu0
        %v885 = vadd.f32 %v807, %v882
        %886 = vst.msk [vmem:[%s800] sm:$0xff] %vm309, %v885
        %887 = vst.msk [vmem:[%s775] sm:$0xff] %vm409, %v782
        %v888 = vld [vmem:[%s236] sm:$0xff]
        %v889 = vmul.f32 %v888, 0.17677669
        %v890 = vld [vmem:[%s245] sm:$0xff]
        %v891 = vld [vmem:[%s254] sm:$0xff]
        %893 = vrot.lane.b32.xlu0 %v889, 32
        %v894 = vpop.permute.xlu0 %893
        %896 = vrot.lane.b32.xlu0 %v890, 32
        %v897 = vpop.permute.xlu0 %896
        %v898 = vsel %vm309, %v894, 0
        %v900 = vsel %vm309, %v897, 0
        %902 = vmatprep.subr.mxu0 0.0
        %903 = vmatpush1.xpose.msra.mxu0 %v900
        %904 = vmatprep.subr.mxu0 0.0
        %905 = vmatpush1.xpose.msra.mxu0 0.0
        %906 = vmatprep.subr.mxu0 0.0
        %907 = vmatpush1.xpose.msra.mxu0 0.0
        %908 = vmatprep.subr.mxu0 0.0
        %909 = vmatpush1.xpose.msra.mxu0 0.0
        %910 = vmatprep.subr.mxu0 0.0
        %911 = vmatpush1.xpose.msra.mxu0 0.0
        %912 = vmatprep.subr.mxu0 0.0
        %913 = vmatpush1.xpose.msra.mxu0 0.0
        %914 = vmatprep.subr.mxu0 0.0
        %915 = vmatpush1.xpose.msra.mxu0 0.0
        %916 = vmatprep.subr.mxu0 0.0
        %917 = vmatpush1.xpose.msra.mxu0 0.0
        %918 = vmatprep.subr.mxu0 0.0
        %919 = vmatpush1.xpose.msra.mxu0 0.0
        %920 = vmatprep.subr.mxu0 0.0
        %921 = vmatpush1.xpose.msra.mxu0 0.0
        %922 = vmatprep.subr.mxu0 0.0
        %923 = vmatpush1.xpose.msra.mxu0 0.0
        %924 = vmatprep.subr.mxu0 0.0
        %925 = vmatpush1.xpose.msra.mxu0 0.0
        %926 = vmatprep.subr.mxu0 0.0
        %927 = vmatpush1.xpose.msra.mxu0 0.0
        %928 = vmatprep.subr.mxu0 0.0
        %929 = vmatpush1.xpose.msra.mxu0 0.0
        %930 = vmatprep.subr.mxu0 0.0
        %931 = vmatpush1.xpose.msra.mxu0 0.0
        %932 = vmatprep.subr.mxu0 0.0
        %933 = vmatpush1.xpose.msra.mxu0 0.0
        %934 = vmatprep.subr.mxu0 0.0
        %935 = vmatpush1.xpose.msra.mxu0 0.0
        %936 = vmatprep.subr.mxu0 0.0
        %937 = vmatpush1.xpose.msra.mxu0 0.0
        %938 = vmatprep.subr.mxu0 0.0
        %939 = vmatpush1.xpose.msra.mxu0 0.0
        %940 = vmatprep.subr.mxu0 0.0
        %941 = vmatpush1.xpose.msra.mxu0 0.0
        %942 = vmatprep.subr.mxu0 0.0
        %943 = vmatpush1.xpose.msra.mxu0 0.0
        %944 = vmatprep.subr.mxu0 0.0
        %945 = vmatpush1.xpose.msra.mxu0 0.0
        %946 = vmatprep.subr.mxu0 0.0
        %947 = vmatpush1.xpose.msra.mxu0 0.0
        %948 = vmatprep.subr.mxu0 0.0
        %949 = vmatpush1.xpose.msra.mxu0 0.0
        %950 = vmatprep.subr.mxu0 0.0
        %951 = vmatpush1.xpose.msra.mxu0 0.0
        %952 = vmatprep.subr.mxu0 0.0
        %953 = vmatpush1.xpose.msra.mxu0 0.0
        %954 = vmatprep.subr.mxu0 0.0
        %955 = vmatpush1.xpose.msra.mxu0 0.0
        %956 = vmatprep.subr.mxu0 0.0
        %957 = vmatpush1.xpose.msra.mxu0 0.0
        %958 = vmatprep.subr.mxu0 0.0
        %959 = vmatpush1.xpose.msra.mxu0 0.0
        %960 = vmatprep.subr.mxu0 0.0
        %961 = vmatpush1.xpose.msra.mxu0 0.0
        %962 = vmatprep.subr.mxu0 0.0
        %963 = vmatpush1.xpose.msra.mxu0 0.0
        %964 = vmatprep.subr.mxu0 0.0
        %965 = vmatpush1.xpose.msra.mxu0 0.0
        %966 = vmatprep.mubr.f32.mxu0 0.0
        %967 = vmatmul.mubr.f32.gmra.mrb[0].mxu0 %v898
        %v968 = vpop.f32.mrb[0].mxu0
        %v969 = vadd.f32 0.0, %v968
        %v970 = vpop.f32.mrb[0].mxu0
        %971 = vdwg.mxu0
        %s972 = scalar_lea.vmem [#allocation2], 24
        %v973 = vld [vmem:[%s972] sm:$0xff]
        %s974 = scalar_lea.vmem [#allocation3], 24
        %v975 = vld [vmem:[%s974] sm:$0xff]
        %v976 = vsel %vm388, %v969, -inf
        %977 = vmax.xlane.f32.xlu0 %v976
        %v978 = vpop.xlane.xlu0 %977
        %v979 = vmax.f32 %v973, %v978
        %v980 = vsub.f32 %v973, %v979
        %v981 = vmul.f32 %v980, 1.442695
        %v982 = vpow.pop %v981
        %984 = vset.pattern.permute.xlu0 0
        %985 = vperm.xlu0 %984, %v979
        %v986 = vpop.permute.xlu0 %985
        %v988 = vsub.f32 %v969, %v986
        %v989 = vmul.f32 %v988, 1.442695
        %v990 = vpow.pop %v989
        %v991 = vmul.f32 %v982, %v975
        %v992 = vsel %vm388, %v990, 0.0
        %993 = vadd.xlane.f32.xlu0 %v992
        %v994 = vpop.xlane.xlu0 %993
        %v995 = vadd.f32 %v991, %v994
        %996 = vst.msk [vmem:[%s974] sm:$0xff] %vm409, %v995
        %s997 = scalar_lea.vmem [#allocation4], 24
        %v998 = vld [vmem:[%s997] sm:$0xff]
        %1000 = vset.pattern.permute.xlu0 0
        %1001 = vperm.xlu0 %1000, %v982
        %v1002 = vpop.permute.xlu0 %1001
        %v1004 = vmul.f32 %v1002, %v998
        %1006 = vrot.lane.b32.xlu0 %v891, 32
        %v1007 = vpop.permute.xlu0 %1006
        %v1010 = vsel %vm388, %v990, 0
        %1012 = vmatprep.subr.mxu0 0.0
        %1013 = vmatpush1.msra.mxu0 %v1007
        %1014 = vmatprep.subr.mxu0 0.0
        %1015 = vmatpush1.msra.mxu0 0.0
        %1016 = vmatprep.subr.mxu0 0.0
        %1017 = vmatpush1.msra.mxu0 0.0
        %1018 = vmatprep.subr.mxu0 0.0
        %1019 = vmatpush1.msra.mxu0 0.0
        %1020 = vmatprep.subr.mxu0 0.0
        %1021 = vmatpush1.msra.mxu0 0.0
        %1022 = vmatprep.subr.mxu0 0.0
        %1023 = vmatpush1.msra.mxu0 0.0
        %1024 = vmatprep.subr.mxu0 0.0
        %1025 = vmatpush1.msra.mxu0 0.0
        %1026 = vmatprep.subr.mxu0 0.0
        %1027 = vmatpush1.msra.mxu0 0.0
        %1028 = vmatprep.subr.mxu0 0.0
        %1029 = vmatpush1.msra.mxu0 0.0
        %1030 = vmatprep.subr.mxu0 0.0
        %1031 = vmatpush1.msra.mxu0 0.0
        %1032 = vmatprep.subr.mxu0 0.0
        %1033 = vmatpush1.msra.mxu0 0.0
        %1034 = vmatprep.subr.mxu0 0.0
        %1035 = vmatpush1.msra.mxu0 0.0
        %1036 = vmatprep.subr.mxu0 0.0
        %1037 = vmatpush1.msra.mxu0 0.0
        %1038 = vmatprep.subr.mxu0 0.0
        %1039 = vmatpush1.msra.mxu0 0.0
        %1040 = vmatprep.subr.mxu0 0.0
        %1041 = vmatpush1.msra.mxu0 0.0
        %1042 = vmatprep.subr.mxu0 0.0
        %1043 = vmatpush1.msra.mxu0 0.0
        %1044 = vmatprep.subr.mxu0 0.0
        %1045 = vmatpush1.msra.mxu0 0.0
        %1046 = vmatprep.subr.mxu0 0.0
        %1047 = vmatpush1.msra.mxu0 0.0
        %1048 = vmatprep.subr.mxu0 0.0
        %1049 = vmatpush1.msra.mxu0 0.0
        %1050 = vmatprep.subr.mxu0 0.0
        %1051 = vmatpush1.msra.mxu0 0.0
        %1052 = vmatprep.subr.mxu0 0.0
        %1053 = vmatpush1.msra.mxu0 0.0
        %1054 = vmatprep.subr.mxu0 0.0
        %1055 = vmatpush1.msra.mxu0 0.0
        %1056 = vmatprep.subr.mxu0 0.0
        %1057 = vmatpush1.msra.mxu0 0.0
        %1058 = vmatprep.subr.mxu0 0.0
        %1059 = vmatpush1.msra.mxu0 0.0
        %1060 = vmatprep.subr.mxu0 0.0
        %1061 = vmatpush1.msra.mxu0 0.0
        %1062 = vmatprep.subr.mxu0 0.0
        %1063 = vmatpush1.msra.mxu0 0.0
        %1064 = vmatprep.subr.mxu0 0.0
        %1065 = vmatpush1.msra.mxu0 0.0
        %1066 = vmatprep.subr.mxu0 0.0
        %1067 = vmatpush1.msra.mxu0 0.0
        %1068 = vmatprep.subr.mxu0 0.0
        %1069 = vmatpush1.msra.mxu0 0.0
        %1070 = vmatprep.subr.mxu0 0.0
        %1071 = vmatpush1.msra.mxu0 0.0
        %1072 = vmatprep.subr.mxu0 0.0
        %1073 = vmatpush1.msra.mxu0 0.0
        %1074 = vmatprep.subr.mxu0 0.0
        %1075 = vmatpush1.msra.mxu0 0.0
        %1076 = vmatprep.mubr.f32.mxu0 0.0
        %1077 = vmatmul.mubr.f32.gmra.mrb[0].mxu0 %v1010
        %v1078 = vpop.f32.mrb[0].mxu0
        %v1079 = vadd.f32 0.0, %v1078
        %v1080 = vpop.f32.mrb[0].mxu0
        %1081 = vdwg.mxu0
        %v1082 = vadd.f32 %v1004, %v1079
        %1083 = vst.msk [vmem:[%s997] sm:$0xff] %vm309, %v1082
        %1084 = vst.msk [vmem:[%s972] sm:$0xff] %vm409, %v979
        // Predicated region
        $region49: #{tpu_custom_call.1} parent=31 // pred_check
          %p1085 = pneg %p287
        $region50: #{tpu_custom_call.1} parent=31 // pred_check_branch
          %1087 = sbr.rel (%p1085) target = $region52
        $region51: #{tpu_custom_call.1} parent=31 // pred_region
          %v1088 = vld [vmem:[#allocation3] sm:$0xff]
          %v1089 = vrcp.pop %v1088
          %v1090 = vld [vmem:[#allocation4] sm:$0xff]
          %1092 = vset.pattern.permute.xlu0 0
          %1093 = vperm.xlu0 %1092, %v1089
          %v1094 = vpop.permute.xlu0 %1093
          %v1096 = vmul.f32 %v1090, %v1094
          %1097 = vst.msk [vmem:[%s286] sm:$0xff] %vm309, %v1096
          %v1098 = vld [vmem:[%s580] sm:$0xff]
          %v1099 = vrcp.pop %v1098
          %v1100 = vld [vmem:[%s603] sm:$0xff]
          %1102 = vset.pattern.permute.xlu0 0
          %1103 = vperm.xlu0 %1102, %v1099
          %v1104 = vpop.permute.xlu0 %1103
          %v1106 = vmul.f32 %v1100, %v1104
          %1108 = vrot.lane.b32.xlu0 %v1106, 32
          %v1109 = vpop.permute.xlu0 %1108
          %vm1111 = vcmask 523520
          %1112 = vst.msk [vmem:[%s286] sm:$0xff] %vm1111, %v1109
          %v1113 = vld [vmem:[%s777] sm:$0xff]
          %v1114 = vrcp.pop %v1113
          %v1115 = vld [vmem:[%s800] sm:$0xff]
          %1117 = vset.pattern.permute.xlu0 0
          %1118 = vperm.xlu0 %1117, %v1114
          %v1119 = vpop.permute.xlu0 %1118
          %v1121 = vmul.f32 %v1115, %v1119
          %1123 = vrot.lane.b32.xlu0 %v1121, 64
          %v1124 = vpop.permute.xlu0 %1123
          %vm1126 = vcmask 785920
          %1127 = vst.msk [vmem:[%s286] sm:$0xff] %vm1126, %v1124
          %v1128 = vld [vmem:[%s974] sm:$0xff]
          %v1129 = vrcp.pop %v1128
          %v1130 = vld [vmem:[%s997] sm:$0xff]
          %1132 = vset.pattern.permute.xlu0 0
          %1133 = vperm.xlu0 %1132, %v1129
          %v1134 = vpop.permute.xlu0 %1133
          %v1136 = vmul.f32 %v1130, %v1134
          %1138 = vrot.lane.b32.xlu0 %v1136, 96
          %v1139 = vpop.permute.xlu0 %1138
          %vm1141 = vcmask 1048320
          %1142 = vst.msk [vmem:[%s286] sm:$0xff] %vm1141, %v1139
        $region52: #{tpu_custom_call.1} parent=31 // pred_fallthru
          _
        %s1143 = sand.u32 %s136, 1
        %s1144 = scalar_lea.sflag [#allocation7], %s1143
        %s1145 = sand.u32 %s136, 1
        %s1146 = smul.addr %s1145, 8
        %s1147 = scalar_lea.vmem [#allocation11], %s1146
        // Predicated region
        $region53: #{tpu_custom_call.1} parent=31 // pred_check
          %p1148 = pneg %p146
        $region54: #{tpu_custom_call.1} parent=31 // pred_check_branch
          %1150 = sbr.rel (%p1148) target = $region56
        $region55: #{tpu_custom_call.1} parent=31 // pred_region
          %s1152 = ssub.s32 128, 128
          %1153 = vsyncadd %s1144, %s1152
          %s1154 = sadd.s32 %s29, %s28
          %s1155 = smul.addr %s1154, 128
          %s1156 = scalar_lea.hbm %s3, %s1155
          %s1158 = sshll.u32 %s1147, 4
          %s1159 = int_to_ptr.vmem [resolvable:$true] %s1158
          %1161 = dma.vmem_to_hbm [thread:$0]  %s1159, 128, %s1156, %s1144
        $region56: #{tpu_custom_call.1} parent=31 // pred_fallthru
          _
      $region32: #{tpu_custom_call.1} parent=5 // pred_fallthru
        _
      %p1162 = scmp.le.s32.totalorder 2, %s18
      // Predicated region
      $region57: #{tpu_custom_call.1} parent=5 // pred_check
        %p1163 = pneg %p1162
      $region58: #{tpu_custom_call.1} parent=5 // pred_check_branch
        %1165 = sbr.rel (%p1163) target = $region60
      $region59: #{tpu_custom_call.1} parent=5 // pred_region
        %s1166 = ssub.s32 %s18, 2
        // Predicated region
        $region61: #{tpu_custom_call.1} parent=59 // pred_check
          %p1167 = pneg %p152
        $region62: #{tpu_custom_call.1} parent=59 // pred_check_branch
          %1169 = sbr.rel (%p1167) target = $region64
        $region63: #{tpu_custom_call.1} parent=59 // pred_region
          %s1170 = sand.u32 %s137, 1
          %s1171 = scalar_lea.sflag [#allocation7], %s1170
          %s1172 = sand.u32 %s137, 1
          %s1173 = smul.addr %s1172, 8
          %s1174 = scalar_lea.vmem [#allocation11], %s1173
          %1175 = dma.done %s1171, 128
        $region64: #{tpu_custom_call.1} parent=59 // pred_fallthru
          _
      $region60: #{tpu_custom_call.1} parent=5 // pred_fallthru
        _
    $region6: #{tpu_custom_call.1} parent=1 // loop_footer
      %s22 = sadd.s32 1, %s18
    $region7: #{tpu_custom_call.1} parent=1 // loop_footer_branch
      %17 = sbr.rel target = $region3
    $region8: #{tpu_custom_call.1} parent=1 // loop_exit
      _
    %1176 = vsyncpa [#allocation6], 1
    %s1177 = scalar_lea.sflag [#allocation6], 1
    %1178 = vsyncpa %s1177, 1
    %1179 = vsyncpa [#allocation9], 1
    %s1180 = scalar_lea.sflag [#allocation9], 1
    %1181 = vsyncpa %s1180, 1
    %1182 = vsyncpa [#allocation7], 1
    %s1183 = scalar_lea.sflag [#allocation7], 1
    %1184 = vsyncpa %s1183, 1

</llo_original>
